<compile_context>
chip_gen: v5e
topology: v5e:2x2
jax: 0.10.0
libtpu: 0.0.40
codegen_flags: <defaults>
</compile_context>

<pallas_src>
import math
import functools

import jax
import jax.numpy as jnp
from jax import lax
from jax.experimental import pallas as pl
from jax.experimental.pallas import tpu as pltpu


# ---------------- in-kernel helpers (traced inside the fused kernel) ----------------

def _lorentz_tail(h, adj_bf16, col0_mask, c, scale_cl):
    """LorentzLinear time/scale re-normalisation followed by LorentzAgg (use_att=0).

    h is f32; adj_bf16 is the bf16 adjacency; col0_mask is the hoisted (time-column) mask.
    """
    sqrt_c = math.sqrt(c)
    time_in = h[:, 0:1]
    full_sq = jnp.sum(h * h, axis=-1, keepdims=True)
    narrow_sq = jnp.maximum(full_sq - time_in * time_in, 1e-8)   # sum over spatial cols
    # sigmoid via a single EUP transcendental: sigmoid(x) = 0.5*(tanh(x/2)+1)
    time = (0.5 * (jnp.tanh(0.5 * time_in) + 1.0)) * scale_cl + (sqrt_c + 0.5)
    # sqrt(clamp((time^2-c)/narrow_sq, 1e-8)) == max(sqrt(time^2-c)*rsqrt(narrow_sq), 1e-4)
    # (time > sqrt(c)+0.5 so time^2-c > 0); one rsqrt instead of recip+sqrt.
    sfac = jnp.maximum(jnp.sqrt(time * time - c) * lax.rsqrt(narrow_sq), 1e-4)
    hn = jnp.where(col0_mask, time, h * sfac)                    # cat([time, x_narrow*s])
    # LorentzAgg: neighbourhood aggregation (bf16 MXU operands, f32 accumulate).
    s = jnp.dot(adj_bf16, hn.astype(jnp.bfloat16), preferred_element_type=jnp.float32)
    s0 = s[:, 0:1]
    s_sq = jnp.sum(s * s, axis=-1, keepdims=True)
    lorentz = jnp.abs(2.0 * s0 * s0 - s_sq)                      # | -<s, s>_L |
    return s * (sqrt_c * lax.rsqrt(jnp.maximum(lorentz, 1e-8)))


# ---------------- the single fused Pallas kernel ----------------

def hybonet_fused_kernel(feat_ref, adj_ref, *rest, c, scales):
    """Fused HyboNet forward: expmap0 -> n LorentzGraphConvolutions -> LorentzDecoder.

    rest = [w0_time, w0_rest, b0,  (wt_i, b_i) for i>=1 ...,  cls_eff, dbias_eff, out]
    All operands are whole-array VMEM blocks; intermediates stay on-chip.
    """
    n_layers = len(scales)
    o_ref = rest[-1]
    cls_ref, dbias_ref = rest[-3], rest[-2]
    layer_refs = rest[:-3]

    sqrt_c = math.sqrt(c)
    adj = adj_ref[...]                                           # bf16, reused by all layers
    feat = feat_ref[...]

    # ---- expmap0 at the origin; time column built in-kernel (input col 0 == 0) ----
    sq = jnp.maximum(jnp.sum(feat * feat, axis=-1, keepdims=True), 1e-8)
    nomin = jnp.sqrt(sq)
    inv_nomin = lax.rsqrt(sq)                                    # exact 1/||u||
    theta = nomin * (1.0 / sqrt_c)
    # TODO(synk): cosh/sinh via exp overflows f32 for theta > ~88 (parity with torch.cosh).
    e_pos = jnp.exp(theta)
    e_neg = jnp.exp(-theta)                                      # exact; no cancellation near 0
    x_time = (0.5 * sqrt_c) * (e_pos + e_neg)                    # sqrt(c)*cosh, (N, 1)
    x_spat = ((0.5 * sqrt_c) * (e_pos - e_neg) * inv_nomin) * feat   # sqrt(c)*sinh*u/|u|

    # ---- hoisted time-column masks: one iota+compare per unique layer-output shape ----
    masks = {}

    def col0_mask(shape):
        if shape not in masks:
            masks[shape] = lax.broadcasted_iota(jnp.int32, shape, 1) == 0
        return masks[shape]

    # ---- layer 0: LorentzLinear on [x_time | x_spat] with split weight rows ----
    # TODO(synk): nn.Dropout is modelled as inference-mode identity.
    w0t = layer_refs[0][...]                                     # (1, d1) time row of W^T
    w0r = layer_refs[1][...]                                     # (F, d1) spatial rows
    b0 = layer_refs[2][...]
    h = (x_time * w0t
         + jnp.dot(x_spat.astype(jnp.bfloat16), w0r.astype(jnp.bfloat16),
                   preferred_element_type=jnp.float32)
         + b0)
    x = _lorentz_tail(h, adj, col0_mask(h.shape), c, scales[0])

    # ---- layers 1..n-1: ReLU -> LorentzLinear -> LorentzAgg ----
    ridx = 3
    for i in range(1, n_layers):
        wt = layer_refs[ridx][...]
        b = layer_refs[ridx + 1][...]
        ridx += 2
        xi = jnp.maximum(x, 0.0)        # acts[i] assumed ReLU (time coord stays positive)
        h = jnp.dot(xi.astype(jnp.bfloat16), wt.astype(jnp.bfloat16),
                    preferred_element_type=jnp.float32) + b
        x = _lorentz_tail(h, adj, col0_mask(h.shape), c, scales[i])

    # ---- LorentzDecoder: 2*c + 2*cinner(x, cls) + bias, sign/2x/2c pre-folded ----
    o_ref[...] = (jnp.dot(x.astype(jnp.bfloat16), cls_ref[...].astype(jnp.bfloat16),
                          preferred_element_type=jnp.float32)
                  + dbias_ref[...])


# ---------------- parameters (torch-like init, then kernel-ready folding) ----------------

def init_params(key, dims, c):
    """Deterministic synthetic parameters matching the torch module's shapes."""
    params = {"layers": []}
    n_conv = len(dims) - 2
    for i in range(n_conv):
        din, dout = dims[i], dims[i + 1]
        key, kw = jax.random.split(key)
        stdv = 1.0 / math.sqrt(dout)
        w = jax.random.uniform(kw, (dout, din), jnp.float32, -stdv, stdv)
        w = w.at[:, 0].set(0.0)               # reset_parameters zeroes input column 0
        b = jnp.zeros((dout,), jnp.float32)
        scale_cl = min(math.exp(math.log(10.0)), 10.0)   # exp(scale).clamp_max(10)
        params["layers"].append(dict(w=w, b=b, scale_cl=scale_cl))
    din, k_out = dims[-2], dims[-1]
    key, kc = jax.random.split(key)
    spatial = jax.random.normal(kc, (k_out, din - 1), jnp.float32) / math.sqrt(din)
    time = jnp.sqrt(jnp.sum(spatial * spatial, -1, keepdims=True) + c)
    params["cls"] = jnp.concatenate([time, spatial], axis=-1)        # valid Lorentz points
    params["dec_bias"] = jnp.zeros((k_out,), jnp.float32)
    return params


def prepare_params(params, c, kpad=128):
    """One-time folding into kernel-ready operands (transposes, split, sign/2x/2c, padding)."""
    layers = params["layers"]
    kp = {"scales": tuple(float(l["scale_cl"]) for l in layers), "layers": []}
    for i, l in enumerate(layers):
        wt = jnp.transpose(l["w"])             # (din, dout) so matmul is x @ W
        b = l["b"].reshape(1, -1)
        if i == 0:
            kp["w0_time"] = wt[0:1, :]         # time row (applied to expmap0 time column)
            kp["w0_rest"] = wt[1:, :]          # spatial rows (applied to node features)
            kp["b0"] = b
        else:
            kp["layers"].append((wt, b))
    cls = params["cls"]
    k_out, din = cls.shape
    sign = jnp.concatenate([-jnp.ones((k_out, 1), jnp.float32),
                            jnp.ones((k_out, din - 1), jnp.float32)], axis=1)
    cls_eff = 2.0 * jnp.transpose(cls * sign)                        # (din, k_out)
    dbias_eff = (2.0 * c + params["dec_bias"]).reshape(1, -1)
    pad = kpad - k_out
    kp["cls_eff"] = jnp.pad(cls_eff, ((0, 0), (0, pad)))             # lane-dense decoder
    kp["dbias_eff"] = jnp.pad(dbias_eff, ((0, 0), (0, pad)))
    kp["k_out"] = k_out
    return kp


# ---------------- forward: one pallas_call for the whole network ----------------

def hybonet_forward(kparams, node_feat, adj_bf16, c):
    N = node_feat.shape[0]
    kpad = kparams["cls_eff"].shape[1]
    args = [node_feat, adj_bf16, kparams["w0_time"], kparams["w0_rest"], kparams["b0"]]
    for wt, b in kparams["layers"]:
        args.extend([wt, b])
    args.extend([kparams["cls_eff"], kparams["dbias_eff"]])
    vmem = pl.BlockSpec(memory_space=pltpu.MemorySpace.VMEM)         # pin whole working set
    kern = functools.partial(hybonet_fused_kernel, c=float(c), scales=kparams["scales"])
    out_full = pl.pallas_call(
        kern,
        out_shape=jax.ShapeDtypeStruct((N, kpad), jnp.float32),
        in_specs=[vmem] * len(args),
        out_specs=vmem,
    )(*args)
    return out_full[:, :kparams["k_out"]]


if __name__ == "__main__":
    c = 1.0
    N, F = 64, 31
    dims = [F + 1, 32, 32, 8]                 # 2 LorentzGraphConvolutions + LorentzDecoder
    key = jax.random.PRNGKey(0)
    key, kx, ka = jax.random.split(key, 3)
    node_feat = jax.random.normal(kx, (N, F), jnp.float32)
    # TODO(synk): sparse edge_index / spmm is realised as a dense row-normalised adjacency.
    a = (jax.random.uniform(ka, (N, N)) < 0.1).astype(jnp.float32)
    a = jnp.maximum(a, jnp.transpose(a)) + jnp.eye(N, dtype=jnp.float32)
    adj = a / jnp.sum(a, axis=1, keepdims=True)
    adj_bf16 = adj.astype(jnp.bfloat16)       # bf16 MXU operand, reused by every layer

    params = init_params(key, dims, c)
    kparams = prepare_params(params, c)
    out = hybonet_forward(kparams, node_feat, adj_bf16, c)
    jax.block_until_ready(out)
    assert out.shape == (N, dims[-1]) and out.dtype == jnp.float32
    assert bool(jnp.all(jnp.isfinite(out)))
    print("KERNEL_OK")
</pallas_src>

<mosaic_0001>
module attributes {stable_mosaic.version = 11 : i64} {
  func.func @hybonet_fused_kernel(%arg0: memref<64x31xf32, #tpu.memory_space<vmem>>, %arg1: memref<64x64xbf16, #tpu.memory_space<vmem>>, %arg2: memref<1x32xf32, #tpu.memory_space<vmem>>, %arg3: memref<31x32xf32, #tpu.memory_space<vmem>>, %arg4: memref<1x32xf32, #tpu.memory_space<vmem>>, %arg5: memref<32x32xf32, #tpu.memory_space<vmem>>, %arg6: memref<1x32xf32, #tpu.memory_space<vmem>>, %arg7: memref<32x128xf32, #tpu.memory_space<vmem>>, %arg8: memref<1x128xf32, #tpu.memory_space<vmem>>, %arg9: memref<64x128xf32, #tpu.memory_space<vmem>>) attributes {dimension_semantics = [], scalar_prefetch = 0 : i64, scratch_operands = 0 : i64, tpu.core_type = #tpu.core_type<tc>} {
    %c0 = arith.constant 0 : index
    %c0_0 = arith.constant 0 : index
    %0 = vector.load %arg1[%c0, %c0_0] : memref<64x64xbf16, #tpu.memory_space<vmem>>, vector<64x64xbf16>
    %c0_1 = arith.constant 0 : index
    %c0_2 = arith.constant 0 : index
    %1 = vector.load %arg0[%c0_1, %c0_2] : memref<64x31xf32, #tpu.memory_space<vmem>>, vector<64x31xf32>
    %2 = arith.mulf %1, %1 : vector<64x31xf32>
    %cst = arith.constant dense<0.000000e+00> : vector<64xf32>
    %3 = vector.multi_reduction <add>, %2, %cst [1] : vector<64x31xf32> to vector<64xf32>
    %4 = vector.shape_cast %3 : vector<64xf32> to vector<64x1xf32>
    %cst_3 = arith.constant 9.99999993E-9 : f32
    %5 = vector.broadcast %cst_3 : f32 to vector<64x1xf32>
    %6 = arith.maximumf %4, %5 : vector<64x1xf32>
    %7 = math.sqrt %6 : vector<64x1xf32>
    %8 = math.rsqrt %6 : vector<64x1xf32>
    %cst_4 = arith.constant 1.000000e+00 : f32
    %9 = vector.broadcast %cst_4 : f32 to vector<64x1xf32>
    %10 = arith.mulf %7, %9 : vector<64x1xf32>
    %11 = math.exp %10 : vector<64x1xf32>
    %cst_5 = arith.constant 0.000000e+00 : f32
    %12 = vector.broadcast %cst_5 : f32 to vector<64x1xf32>
    %13 = arith.subf %12, %10 : vector<64x1xf32>
    %14 = math.exp %13 : vector<64x1xf32>
    %15 = arith.addf %11, %14 : vector<64x1xf32>
    %cst_6 = arith.constant 5.000000e-01 : f32
    %16 = vector.broadcast %cst_6 : f32 to vector<64x1xf32>
    %17 = arith.mulf %16, %15 : vector<64x1xf32>
    %18 = arith.subf %11, %14 : vector<64x1xf32>
    %cst_7 = arith.constant 5.000000e-01 : f32
    %19 = vector.broadcast %cst_7 : f32 to vector<64x1xf32>
    %20 = arith.mulf %19, %18 : vector<64x1xf32>
    %21 = arith.mulf %20, %8 : vector<64x1xf32>
    %22 = vector.broadcast %21 : vector<64x1xf32> to vector<64x31xf32>
    %23 = arith.mulf %22, %1 : vector<64x31xf32>
    %c0_8 = arith.constant 0 : index
    %c0_9 = arith.constant 0 : index
    %24 = vector.load %arg2[%c0_8, %c0_9] : memref<1x32xf32, #tpu.memory_space<vmem>>, vector<1x32xf32>
    %c0_10 = arith.constant 0 : index
    %c0_11 = arith.constant 0 : index
    %25 = vector.load %arg3[%c0_10, %c0_11] : memref<31x32xf32, #tpu.memory_space<vmem>>, vector<31x32xf32>
    %c0_12 = arith.constant 0 : index
    %c0_13 = arith.constant 0 : index
    %26 = vector.load %arg4[%c0_12, %c0_13] : memref<1x32xf32, #tpu.memory_space<vmem>>, vector<1x32xf32>
    %27 = vector.broadcast %17 : vector<64x1xf32> to vector<64x32xf32>
    %28 = vector.broadcast %24 : vector<1x32xf32> to vector<64x32xf32>
    %29 = arith.mulf %27, %28 : vector<64x32xf32>
    %30 = arith.truncf %23 : vector<64x31xf32> to vector<64x31xbf16>
    %31 = arith.truncf %25 : vector<31x32xf32> to vector<31x32xbf16>
    %cst_14 = arith.constant dense<0.000000e+00> : vector<64x32xf32>
    %32 = tpu.matmul %30, %31, %cst_14 {dimension_numbers = #tpu.dot_dimension_numbers<[1], [0], [0], [1], [0, 0, 1, 1], [], []>} : vector<64x31xbf16>, vector<31x32xbf16>, vector<64x32xf32> -> vector<64x32xf32>
    %33 = arith.addf %29, %32 : vector<64x32xf32>
    %34 = vector.broadcast %26 : vector<1x32xf32> to vector<64x32xf32>
    %35 = arith.addf %33, %34 : vector<64x32xf32>
    %36 = tpu.iota {dimensions = array<i32: 1>} : vector<64x32xi32>
    %c0_i32 = arith.constant 0 : i32
    %37 = vector.broadcast %c0_i32 : i32 to vector<64x32xi32>
    %38 = arith.cmpi eq, %36, %37 : vector<64x32xi32>
    %39 = vector.extract_strided_slice %35 {offsets = [0, 0], sizes = [64, 1], strides = [1, 1]} : vector<64x32xf32> to vector<64x1xf32>
    %40 = arith.mulf %35, %35 : vector<64x32xf32>
    %cst_15 = arith.constant dense<0.000000e+00> : vector<64xf32>
    %41 = vector.multi_reduction <add>, %40, %cst_15 [1] : vector<64x32xf32> to vector<64xf32>
    %42 = vector.shape_cast %41 : vector<64xf32> to vector<64x1xf32>
    %43 = arith.mulf %39, %39 : vector<64x1xf32>
    %44 = arith.subf %42, %43 : vector<64x1xf32>
    %cst_16 = arith.constant 9.99999993E-9 : f32
    %45 = vector.broadcast %cst_16 : f32 to vector<64x1xf32>
    %46 = arith.maximumf %44, %45 : vector<64x1xf32>
    %cst_17 = arith.constant 5.000000e-01 : f32
    %47 = vector.broadcast %cst_17 : f32 to vector<64x1xf32>
    %48 = arith.mulf %47, %39 : vector<64x1xf32>
    %49 = math.tanh %48 : vector<64x1xf32>
    %cst_18 = arith.constant 1.000000e+00 : f32
    %50 = vector.broadcast %cst_18 : f32 to vector<64x1xf32>
    %51 = arith.addf %49, %50 : vector<64x1xf32>
    %cst_19 = arith.constant 5.000000e-01 : f32
    %52 = vector.broadcast %cst_19 : f32 to vector<64x1xf32>
    %53 = arith.mulf %52, %51 : vector<64x1xf32>
    %cst_20 = arith.constant 1.000000e+01 : f32
    %54 = vector.broadcast %cst_20 : f32 to vector<64x1xf32>
    %55 = arith.mulf %53, %54 : vector<64x1xf32>
    %cst_21 = arith.constant 1.500000e+00 : f32
    %56 = vector.broadcast %cst_21 : f32 to vector<64x1xf32>
    %57 = arith.addf %55, %56 : vector<64x1xf32>
    %58 = arith.mulf %57, %57 : vector<64x1xf32>
    %cst_22 = arith.constant 1.000000e+00 : f32
    %59 = vector.broadcast %cst_22 : f32 to vector<64x1xf32>
    %60 = arith.subf %58, %59 : vector<64x1xf32>
    %61 = math.sqrt %60 : vector<64x1xf32>
    %62 = math.rsqrt %46 : vector<64x1xf32>
    %63 = arith.mulf %61, %62 : vector<64x1xf32>
    %cst_23 = arith.constant 9.99999974E-5 : f32
    %64 = vector.broadcast %cst_23 : f32 to vector<64x1xf32>
    %65 = arith.maximumf %63, %64 : vector<64x1xf32>
    %66 = vector.broadcast %65 : vector<64x1xf32> to vector<64x32xf32>
    %67 = arith.mulf %35, %66 : vector<64x32xf32>
    %68 = vector.shape_cast %57 : vector<64x1xf32> to vector<64x1xf32>
    %69 = vector.broadcast %68 : vector<64x1xf32> to vector<64x32xf32>
    %70 = arith.select %38, %69, %67 : vector<64x32xi1>, vector<64x32xf32>
    %71 = arith.truncf %70 : vector<64x32xf32> to vector<64x32xbf16>
    %cst_24 = arith.constant dense<0.000000e+00> : vector<64x32xf32>
    %72 = tpu.matmul %0, %71, %cst_24 {dimension_numbers = #tpu.dot_dimension_numbers<[1], [0], [0], [1], [0, 0, 1, 1], [], []>} : vector<64x64xbf16>, vector<64x32xbf16>, vector<64x32xf32> -> vector<64x32xf32>
    %73 = vector.extract_strided_slice %72 {offsets = [0, 0], sizes = [64, 1], strides = [1, 1]} : vector<64x32xf32> to vector<64x1xf32>
    %74 = arith.mulf %72, %72 : vector<64x32xf32>
    %cst_25 = arith.constant dense<0.000000e+00> : vector<64xf32>
    %75 = vector.multi_reduction <add>, %74, %cst_25 [1] : vector<64x32xf32> to vector<64xf32>
    %76 = vector.shape_cast %75 : vector<64xf32> to vector<64x1xf32>
    %cst_26 = arith.constant 2.000000e+00 : f32
    %77 = vector.broadcast %cst_26 : f32 to vector<64x1xf32>
    %78 = arith.mulf %77, %73 : vector<64x1xf32>
    %79 = arith.mulf %78, %73 : vector<64x1xf32>
    %80 = arith.subf %79, %76 : vector<64x1xf32>
    %81 = math.absf %80 : vector<64x1xf32>
    %cst_27 = arith.constant 9.99999993E-9 : f32
    %82 = vector.broadcast %cst_27 : f32 to vector<64x1xf32>
    %83 = arith.maximumf %81, %82 : vector<64x1xf32>
    %84 = math.rsqrt %83 : vector<64x1xf32>
    %cst_28 = arith.constant 1.000000e+00 : f32
    %85 = vector.broadcast %cst_28 : f32 to vector<64x1xf32>
    %86 = arith.mulf %85, %84 : vector<64x1xf32>
    %87 = vector.broadcast %86 : vector<64x1xf32> to vector<64x32xf32>
    %88 = arith.mulf %72, %87 : vector<64x32xf32>
    %c0_29 = arith.constant 0 : index
    %c0_30 = arith.constant 0 : index
    %89 = vector.load %arg5[%c0_29, %c0_30] : memref<32x32xf32, #tpu.memory_space<vmem>>, vector<32x32xf32>
    %c0_31 = arith.constant 0 : index
    %c0_32 = arith.constant 0 : index
    %90 = vector.load %arg6[%c0_31, %c0_32] : memref<1x32xf32, #tpu.memory_space<vmem>>, vector<1x32xf32>
    %cst_33 = arith.constant 0.000000e+00 : f32
    %91 = vector.broadcast %cst_33 : f32 to vector<64x32xf32>
    %92 = arith.maximumf %88, %91 : vector<64x32xf32>
    %93 = arith.truncf %92 : vector<64x32xf32> to vector<64x32xbf16>
    %94 = arith.truncf %89 : vector<32x32xf32> to vector<32x32xbf16>
    %cst_34 = arith.constant dense<0.000000e+00> : vector<64x32xf32>
    %95 = tpu.matmul %93, %94, %cst_34 {dimension_numbers = #tpu.dot_dimension_numbers<[1], [0], [0], [1], [0, 0, 1, 1], [], []>} : vector<64x32xbf16>, vector<32x32xbf16>, vector<64x32xf32> -> vector<64x32xf32>
    %96 = vector.broadcast %90 : vector<1x32xf32> to vector<64x32xf32>
    %97 = arith.addf %95, %96 : vector<64x32xf32>
    %98 = vector.extract_strided_slice %97 {offsets = [0, 0], sizes = [64, 1], strides = [1, 1]} : vector<64x32xf32> to vector<64x1xf32>
    %99 = arith.mulf %97, %97 : vector<64x32xf32>
    %cst_35 = arith.constant dense<0.000000e+00> : vector<64xf32>
    %100 = vector.multi_reduction <add>, %99, %cst_35 [1] : vector<64x32xf32> to vector<64xf32>
    %101 = vector.shape_cast %100 : vector<64xf32> to vector<64x1xf32>
    %102 = arith.mulf %98, %98 : vector<64x1xf32>
    %103 = arith.subf %101, %102 : vector<64x1xf32>
    %cst_36 = arith.constant 9.99999993E-9 : f32
    %104 = vector.broadcast %cst_36 : f32 to vector<64x1xf32>
    %105 = arith.maximumf %103, %104 : vector<64x1xf32>
    %cst_37 = arith.constant 5.000000e-01 : f32
    %106 = vector.broadcast %cst_37 : f32 to vector<64x1xf32>
    %107 = arith.mulf %106, %98 : vector<64x1xf32>
    %108 = math.tanh %107 : vector<64x1xf32>
    %cst_38 = arith.constant 1.000000e+00 : f32
    %109 = vector.broadcast %cst_38 : f32 to vector<64x1xf32>
    %110 = arith.addf %108, %109 : vector<64x1xf32>
    %cst_39 = arith.constant 5.000000e-01 : f32
    %111 = vector.broadcast %cst_39 : f32 to vector<64x1xf32>
    %112 = arith.mulf %111, %110 : vector<64x1xf32>
    %cst_40 = arith.constant 1.000000e+01 : f32
    %113 = vector.broadcast %cst_40 : f32 to vector<64x1xf32>
    %114 = arith.mulf %112, %113 : vector<64x1xf32>
    %cst_41 = arith.constant 1.500000e+00 : f32
    %115 = vector.broadcast %cst_41 : f32 to vector<64x1xf32>
    %116 = arith.addf %114, %115 : vector<64x1xf32>
    %117 = arith.mulf %116, %116 : vector<64x1xf32>
    %cst_42 = arith.constant 1.000000e+00 : f32
    %118 = vector.broadcast %cst_42 : f32 to vector<64x1xf32>
    %119 = arith.subf %117, %118 : vector<64x1xf32>
    %120 = math.sqrt %119 : vector<64x1xf32>
    %121 = math.rsqrt %105 : vector<64x1xf32>
    %122 = arith.mulf %120, %121 : vector<64x1xf32>
    %cst_43 = arith.constant 9.99999974E-5 : f32
    %123 = vector.broadcast %cst_43 : f32 to vector<64x1xf32>
    %124 = arith.maximumf %122, %123 : vector<64x1xf32>
    %125 = vector.broadcast %124 : vector<64x1xf32> to vector<64x32xf32>
    %126 = arith.mulf %97, %125 : vector<64x32xf32>
    %127 = vector.shape_cast %116 : vector<64x1xf32> to vector<64x1xf32>
    %128 = vector.broadcast %127 : vector<64x1xf32> to vector<64x32xf32>
    %129 = arith.select %38, %128, %126 : vector<64x32xi1>, vector<64x32xf32>
    %130 = arith.truncf %129 : vector<64x32xf32> to vector<64x32xbf16>
    %cst_44 = arith.constant dense<0.000000e+00> : vector<64x32xf32>
    %131 = tpu.matmul %0, %130, %cst_44 {dimension_numbers = #tpu.dot_dimension_numbers<[1], [0], [0], [1], [0, 0, 1, 1], [], []>} : vector<64x64xbf16>, vector<64x32xbf16>, vector<64x32xf32> -> vector<64x32xf32>
    %132 = vector.extract_strided_slice %131 {offsets = [0, 0], sizes = [64, 1], strides = [1, 1]} : vector<64x32xf32> to vector<64x1xf32>
    %133 = arith.mulf %131, %131 : vector<64x32xf32>
    %cst_45 = arith.constant dense<0.000000e+00> : vector<64xf32>
    %134 = vector.multi_reduction <add>, %133, %cst_45 [1] : vector<64x32xf32> to vector<64xf32>
    %135 = vector.shape_cast %134 : vector<64xf32> to vector<64x1xf32>
    %cst_46 = arith.constant 2.000000e+00 : f32
    %136 = vector.broadcast %cst_46 : f32 to vector<64x1xf32>
    %137 = arith.mulf %136, %132 : vector<64x1xf32>
    %138 = arith.mulf %137, %132 : vector<64x1xf32>
    %139 = arith.subf %138, %135 : vector<64x1xf32>
    %140 = math.absf %139 : vector<64x1xf32>
    %cst_47 = arith.constant 9.99999993E-9 : f32
    %141 = vector.broadcast %cst_47 : f32 to vector<64x1xf32>
    %142 = arith.maximumf %140, %141 : vector<64x1xf32>
    %143 = math.rsqrt %142 : vector<64x1xf32>
    %cst_48 = arith.constant 1.000000e+00 : f32
    %144 = vector.broadcast %cst_48 : f32 to vector<64x1xf32>
    %145 = arith.mulf %144, %143 : vector<64x1xf32>
    %146 = vector.broadcast %145 : vector<64x1xf32> to vector<64x32xf32>
    %147 = arith.mulf %131, %146 : vector<64x32xf32>
    %148 = arith.truncf %147 : vector<64x32xf32> to vector<64x32xbf16>
    %c0_49 = arith.constant 0 : index
    %c0_50 = arith.constant 0 : index
    %149 = vector.load %arg7[%c0_49, %c0_50] : memref<32x128xf32, #tpu.memory_space<vmem>>, vector<32x128xf32>
    %150 = arith.truncf %149 : vector<32x128xf32> to vector<32x128xbf16>
    %cst_51 = arith.constant dense<0.000000e+00> : vector<64x128xf32>
    %151 = tpu.matmul %148, %150, %cst_51 {dimension_numbers = #tpu.dot_dimension_numbers<[1], [0], [0], [1], [0, 0, 1, 1], [], []>} : vector<64x32xbf16>, vector<32x128xbf16>, vector<64x128xf32> -> vector<64x128xf32>
    %c0_52 = arith.constant 0 : index
    %c0_53 = arith.constant 0 : index
    %152 = vector.load %arg8[%c0_52, %c0_53] : memref<1x128xf32, #tpu.memory_space<vmem>>, vector<1x128xf32>
    %153 = vector.broadcast %152 : vector<1x128xf32> to vector<64x128xf32>
    %154 = arith.addf %151, %153 : vector<64x128xf32>
    %c0_54 = arith.constant 0 : index
    %c0_55 = arith.constant 0 : index
    %155 = vector.load %arg9[%c0_54, %c0_55] : memref<64x128xf32, #tpu.memory_space<vmem>>, vector<64x128xf32>
    tpu.vector_store %arg9[%c0_54, %c0_55], %154 {strides = array<i32>} : memref<64x128xf32, #tpu.memory_space<vmem>>, vector<64x128xf32>,
    return
  }
}

</mosaic_0001>

<llo_original>
// kernel: tpu_custom_call.1
$region0: #{tpu_custom_call.1}
  #allocation0 [shape = 'u32[]', space=smem, size = 0x4, offset = 0x4, fixed_abs, tag = 'smem constant byte address 0x4 - core index']
  #allocation1 [shape = 'u32[72,128]{1,0:T(1,128)}', space=vmem, size = 0x9000, scoped, tag = 'internal scratch']
  %s0 = inlined_call_operand.vmem [shape: f32[64,31], index: 0, kind: input, shape index: {}]
  %s1 = inlined_call_operand.vmem [shape: bf16[64,64], index: 1, kind: input, shape index: {}]
  %s2 = inlined_call_operand.vmem [shape: f32[1,32], index: 2, kind: input, shape index: {}]
  %s3 = inlined_call_operand.vmem [shape: f32[31,32], index: 3, kind: input, shape index: {}]
  %s4 = inlined_call_operand.vmem [shape: f32[1,32], index: 4, kind: input, shape index: {}]
  %s5 = inlined_call_operand.vmem [shape: f32[32,32], index: 5, kind: input, shape index: {}]
  %s6 = inlined_call_operand.vmem [shape: f32[1,32], index: 6, kind: input, shape index: {}]
  %s7 = inlined_call_operand.hbm [shape: f32[32,128], index: 7, kind: input, shape index: {}]
  %s8 = inlined_call_operand.vmem [shape: f32[1,128], index: 8, kind: input, shape index: {}]
  %s9 = inlined_call_operand.hbm [shape: f32[64,128], index: 9, kind: output, shape index: {}]
  %s10 = sld [smem:[#allocation0]]
  $region50: #{tpu_custom_call.1} parent=0
    _
  %s12 = ssub.s32 1, %s10
  %s13 = scalar_select 0, %s12, %s10
  $region1: #{tpu_custom_call.1} parent=0
    #allocation2 [shape = 'u8[16384]{0}', space=vmem, size = 0x4000, scoped, tag = 'input window, operand 7, single buffered']
    #allocation3 [shape = 's32[1]{0}', space=sflag, size = 0x4, scoped, tag = 'scoped memory for tpu_custom_call.1']
    #allocation4 [shape = 's32[1]{0}', space=sflag, size = 0x4, scoped, tag = 'scoped memory for tpu_custom_call.1']
    #allocation5 [shape = 'u8[32768]{0}', space=vmem, size = 0x8000, scoped, tag = 'output window, operand 0, single buffered']
    %14 = vsyncpa [#allocation3], 0
    %15 = vsyncpa [#allocation4], 0
    // Predicated region
    $region2: #{tpu_custom_call.1} parent=1 // pred_check
      _
    $region3: #{tpu_custom_call.1} parent=1 // pred_check_branch
      %17 = sbr.rel (0) target = $region5
    $region4: #{tpu_custom_call.1} parent=1 // pred_region
      _
    $region5: #{tpu_custom_call.1} parent=1 // pred_fallthru
      _
    // Predicated region
    $region6: #{tpu_custom_call.1} parent=1 // pred_check
      _
    $region7: #{tpu_custom_call.1} parent=1 // pred_check_branch
      %19 = sbr.rel (0) target = $region9
    $region8: #{tpu_custom_call.1} parent=1 // pred_region
      _
    $region9: #{tpu_custom_call.1} parent=1 // pred_fallthru
      _
    // Predicated region
    $region10: #{tpu_custom_call.1} parent=1 // pred_check
      _
    $region11: #{tpu_custom_call.1} parent=1 // pred_check_branch
      %21 = sbr.rel (0) target = $region13
    $region12: #{tpu_custom_call.1} parent=1 // pred_region
      _
    $region13: #{tpu_custom_call.1} parent=1 // pred_fallthru
      _
    // Predicated region
    $region14: #{tpu_custom_call.1} parent=1 // pred_check
      _
    $region15: #{tpu_custom_call.1} parent=1 // pred_check_branch
      %23 = sbr.rel (0) target = $region17
    $region16: #{tpu_custom_call.1} parent=1 // pred_region
      _
    $region17: #{tpu_custom_call.1} parent=1 // pred_fallthru
      _
    // Predicated region
    $region18: #{tpu_custom_call.1} parent=1 // pred_check
      _
    $region19: #{tpu_custom_call.1} parent=1 // pred_check_branch
      %25 = sbr.rel (0) target = $region21
    $region20: #{tpu_custom_call.1} parent=1 // pred_region
      _
    $region21: #{tpu_custom_call.1} parent=1 // pred_fallthru
      _
    // Predicated region
    $region22: #{tpu_custom_call.1} parent=1 // pred_check
      _
    $region23: #{tpu_custom_call.1} parent=1 // pred_check_branch
      %27 = sbr.rel (0) target = $region25
    $region24: #{tpu_custom_call.1} parent=1 // pred_region
      _
    $region25: #{tpu_custom_call.1} parent=1 // pred_fallthru
      _
    // Predicated region
    $region26: #{tpu_custom_call.1} parent=1 // pred_check
      _
    $region27: #{tpu_custom_call.1} parent=1 // pred_check_branch
      %29 = sbr.rel (0) target = $region29
    $region28: #{tpu_custom_call.1} parent=1 // pred_region
      _
    $region29: #{tpu_custom_call.1} parent=1 // pred_fallthru
      _
    // Predicated region
    $region30: #{tpu_custom_call.1} parent=1 // pred_check
      _
    $region31: #{tpu_custom_call.1} parent=1 // pred_check_branch
      %31 = sbr.rel (0) target = $region33
    $region32: #{tpu_custom_call.1} parent=1 // pred_region
      %33 = vsyncadd [#allocation3], 0
      %s34 = sshll.u32 %s7, 4
      %s35 = int_to_ptr.hbm [resolvable:$true] %s34
      %s36 = sshll.u32 [#allocation2], 4
      %s37 = int_to_ptr.vmem [resolvable:$true] %s36
      %42 = dma.hbm_to_vmem [thread:$0]  %s35, 512, %s37, [#allocation3], 128, 128, 8
    $region33: #{tpu_custom_call.1} parent=1 // pred_fallthru
      _
    // Predicated region
    $region34: #{tpu_custom_call.1} parent=1 // pred_check
      _
    $region35: #{tpu_custom_call.1} parent=1 // pred_check_branch
      %44 = sbr.rel (0) target = $region37
    $region36: #{tpu_custom_call.1} parent=1 // pred_region
      _
    $region37: #{tpu_custom_call.1} parent=1 // pred_fallthru
      _
    // Predicated region
    $region38: #{tpu_custom_call.1} parent=1 // pred_check
      _
    $region39: #{tpu_custom_call.1} parent=1 // pred_check_branch
      %46 = sbr.rel (0) target = $region41
    $region40: #{tpu_custom_call.1} parent=1 // pred_region
      %48 = dma.done [#allocation3], 512
    $region41: #{tpu_custom_call.1} parent=1 // pred_fallthru
      _
    %v50 = vld [vmem:[%s1] sm:$0xf]
    %v51 = vld [vmem:[%s1 + $0x4] sm:$0xf]
    %v52 = vld [vmem:[%s1 + $0x8] sm:$0xf]
    %v53 = vld [vmem:[%s1 + $0xc] sm:$0xf]
    %v54 = vld [vmem:[%s1 + $0x10] sm:$0xf]
    %v55 = vld [vmem:[%s1 + $0x14] sm:$0xf]
    %v56 = vld [vmem:[%s1 + $0x18] sm:$0xf]
    %v57 = vld [vmem:[%s1 + $0x1c] sm:$0xf]
    %v58 = vld [vmem:[%s0] sm:$0xff]
    %v59 = vld [vmem:[%s0 + $0x8] sm:$0xff]
    %v60 = vld [vmem:[%s0 + $0x10] sm:$0xff]
    %v61 = vld [vmem:[%s0 + $0x18] sm:$0xff]
    %v62 = vld [vmem:[%s0 + $0x20] sm:$0xff]
    %v63 = vld [vmem:[%s0 + $0x28] sm:$0xff]
    %v64 = vld [vmem:[%s0 + $0x30] sm:$0xff]
    %v65 = vld [vmem:[%s0 + $0x38] sm:$0xff]
    %v66 = vmul.f32 %v58, %v58
    %v67 = vmul.f32 %v59, %v59
    %v68 = vmul.f32 %v60, %v60
    %v69 = vmul.f32 %v61, %v61
    %v70 = vmul.f32 %v62, %v62
    %v71 = vmul.f32 %v63, %v63
    %v72 = vmul.f32 %v64, %v64
    %v73 = vmul.f32 %v65, %v65
    %vm74 = vcmask 252928
    %v75 = vsel %vm74, %v66, 0.0
    %76 = vadd.xlane.f32.xlu0 %v75
    %v77 = vpop.xlane.xlu0 %76
    %v78 = vsel %vm74, %v67, 0.0
    %79 = vadd.xlane.f32.xlu0 %v78
    %v80 = vpop.xlane.xlu0 %79
    %v81 = vsel %vm74, %v68, 0.0
    %82 = vadd.xlane.f32.xlu0 %v81
    %v83 = vpop.xlane.xlu0 %82
    %v84 = vsel %vm74, %v69, 0.0
    %85 = vadd.xlane.f32.xlu0 %v84
    %v86 = vpop.xlane.xlu0 %85
    %v87 = vsel %vm74, %v70, 0.0
    %88 = vadd.xlane.f32.xlu0 %v87
    %v89 = vpop.xlane.xlu0 %88
    %v90 = vsel %vm74, %v71, 0.0
    %91 = vadd.xlane.f32.xlu0 %v90
    %v92 = vpop.xlane.xlu0 %91
    %v93 = vsel %vm74, %v72, 0.0
    %94 = vadd.xlane.f32.xlu0 %v93
    %v95 = vpop.xlane.xlu0 %94
    %v96 = vsel %vm74, %v73, 0.0
    %97 = vadd.xlane.f32.xlu0 %v96
    %v98 = vpop.xlane.xlu0 %97
    %v99 = vmax.f32 %v77, 1e-08
    %v100 = vmax.f32 %v80, 1e-08
    %v101 = vmax.f32 %v83, 1e-08
    %v102 = vmax.f32 %v86, 1e-08
    %v103 = vmax.f32 %v89, 1e-08
    %v104 = vmax.f32 %v92, 1e-08
    %v105 = vmax.f32 %v95, 1e-08
    %v106 = vmax.f32 %v98, 1e-08
    %v107 = vrsqrt.pop %v99
    %v108 = vmul.f32 %v107, %v99
    %v109 = vmul.f32 %v108, %v107
    %v110 = vmul.f32 0.5, %v109
    %v111 = vsub.f32 1.5, %v110
    %v112 = vmul.f32 %v107, %v111
    %v113 = vmul.f32 %v99, %v112
    %vm114 = vcmp.eq.f32.partialorder %v99, inf
    %v115 = vsel %vm114, %v99, %v113
    %vm116 = vcmp.eq.f32.partialorder %v99, 0.0
    %v117 = vand.u32 %v99, 2147483648
    %v118 = vsel %vm116, %v117, %v115
    %v119 = vrsqrt.pop %v100
    %v120 = vmul.f32 %v119, %v100
    %v121 = vmul.f32 %v120, %v119
    %v122 = vmul.f32 0.5, %v121
    %v123 = vsub.f32 1.5, %v122
    %v124 = vmul.f32 %v119, %v123
    %v125 = vmul.f32 %v100, %v124
    %vm126 = vcmp.eq.f32.partialorder %v100, inf
    %v127 = vsel %vm126, %v100, %v125
    %vm128 = vcmp.eq.f32.partialorder %v100, 0.0
    %v129 = vand.u32 %v100, 2147483648
    %v130 = vsel %vm128, %v129, %v127
    %v131 = vrsqrt.pop %v101
    %v132 = vmul.f32 %v131, %v101
    %v133 = vmul.f32 %v132, %v131
    %v134 = vmul.f32 0.5, %v133
    %v135 = vsub.f32 1.5, %v134
    %v136 = vmul.f32 %v131, %v135
    %v137 = vmul.f32 %v101, %v136
    %vm138 = vcmp.eq.f32.partialorder %v101, inf
    %v139 = vsel %vm138, %v101, %v137
    %vm140 = vcmp.eq.f32.partialorder %v101, 0.0
    %v141 = vand.u32 %v101, 2147483648
    %v142 = vsel %vm140, %v141, %v139
    %v143 = vrsqrt.pop %v102
    %v144 = vmul.f32 %v143, %v102
    %v145 = vmul.f32 %v144, %v143
    %v146 = vmul.f32 0.5, %v145
    %v147 = vsub.f32 1.5, %v146
    %v148 = vmul.f32 %v143, %v147
    %v149 = vmul.f32 %v102, %v148
    %vm150 = vcmp.eq.f32.partialorder %v102, inf
    %v151 = vsel %vm150, %v102, %v149
    %vm152 = vcmp.eq.f32.partialorder %v102, 0.0
    %v153 = vand.u32 %v102, 2147483648
    %v154 = vsel %vm152, %v153, %v151
    %v155 = vrsqrt.pop %v103
    %v156 = vmul.f32 %v155, %v103
    %v157 = vmul.f32 %v156, %v155
    %v158 = vmul.f32 0.5, %v157
    %v159 = vsub.f32 1.5, %v158
    %v160 = vmul.f32 %v155, %v159
    %v161 = vmul.f32 %v103, %v160
    %vm162 = vcmp.eq.f32.partialorder %v103, inf
    %v163 = vsel %vm162, %v103, %v161
    %vm164 = vcmp.eq.f32.partialorder %v103, 0.0
    %v165 = vand.u32 %v103, 2147483648
    %v166 = vsel %vm164, %v165, %v163
    %v167 = vrsqrt.pop %v104
    %v168 = vmul.f32 %v167, %v104
    %v169 = vmul.f32 %v168, %v167
    %v170 = vmul.f32 0.5, %v169
    %v171 = vsub.f32 1.5, %v170
    %v172 = vmul.f32 %v167, %v171
    %v173 = vmul.f32 %v104, %v172
    %vm174 = vcmp.eq.f32.partialorder %v104, inf
    %v175 = vsel %vm174, %v104, %v173
    %vm176 = vcmp.eq.f32.partialorder %v104, 0.0
    %v177 = vand.u32 %v104, 2147483648
    %v178 = vsel %vm176, %v177, %v175
    %v179 = vrsqrt.pop %v105
    %v180 = vmul.f32 %v179, %v105
    %v181 = vmul.f32 %v180, %v179
    %v182 = vmul.f32 0.5, %v181
    %v183 = vsub.f32 1.5, %v182
    %v184 = vmul.f32 %v179, %v183
    %v185 = vmul.f32 %v105, %v184
    %vm186 = vcmp.eq.f32.partialorder %v105, inf
    %v187 = vsel %vm186, %v105, %v185
    %vm188 = vcmp.eq.f32.partialorder %v105, 0.0
    %v189 = vand.u32 %v105, 2147483648
    %v190 = vsel %vm188, %v189, %v187
    %v191 = vrsqrt.pop %v106
    %v192 = vmul.f32 %v191, %v106
    %v193 = vmul.f32 %v192, %v191
    %v194 = vmul.f32 0.5, %v193
    %v195 = vsub.f32 1.5, %v194
    %v196 = vmul.f32 %v191, %v195
    %v197 = vmul.f32 %v106, %v196
    %vm198 = vcmp.eq.f32.partialorder %v106, inf
    %v199 = vsel %vm198, %v106, %v197
    %vm200 = vcmp.eq.f32.partialorder %v106, 0.0
    %v201 = vand.u32 %v106, 2147483648
    %v202 = vsel %vm200, %v201, %v199
    %v203 = vrsqrt.pop %v99
    %v204 = vmul.f32 %v203, %v99
    %v205 = vmul.f32 %v204, %v203
    %v206 = vmul.f32 0.5, %v205
    %v207 = vsub.f32 1.5, %v206
    %v208 = vmul.f32 %v203, %v207
    %vm209 = vweird.f32 %v99
    %vm210 = vweird.f32 %v203
    %vm211 = vmor %vm209, %vm210
    %v212 = vsel %vm211, %v203, %v208
    %v213 = vrsqrt.pop %v100
    %v214 = vmul.f32 %v213, %v100
    %v215 = vmul.f32 %v214, %v213
    %v216 = vmul.f32 0.5, %v215
    %v217 = vsub.f32 1.5, %v216
    %v218 = vmul.f32 %v213, %v217
    %vm219 = vweird.f32 %v100
    %vm220 = vweird.f32 %v213
    %vm221 = vmor %vm219, %vm220
    %v222 = vsel %vm221, %v213, %v218
    %v223 = vrsqrt.pop %v101
    %v224 = vmul.f32 %v223, %v101
    %v225 = vmul.f32 %v224, %v223
    %v226 = vmul.f32 0.5, %v225
    %v227 = vsub.f32 1.5, %v226
    %v228 = vmul.f32 %v223, %v227
    %vm229 = vweird.f32 %v101
    %vm230 = vweird.f32 %v223
    %vm231 = vmor %vm229, %vm230
    %v232 = vsel %vm231, %v223, %v228
    %v233 = vrsqrt.pop %v102
    %v234 = vmul.f32 %v233, %v102
    %v235 = vmul.f32 %v234, %v233
    %v236 = vmul.f32 0.5, %v235
    %v237 = vsub.f32 1.5, %v236
    %v238 = vmul.f32 %v233, %v237
    %vm239 = vweird.f32 %v102
    %vm240 = vweird.f32 %v233
    %vm241 = vmor %vm239, %vm240
    %v242 = vsel %vm241, %v233, %v238
    %v243 = vrsqrt.pop %v103
    %v244 = vmul.f32 %v243, %v103
    %v245 = vmul.f32 %v244, %v243
    %v246 = vmul.f32 0.5, %v245
    %v247 = vsub.f32 1.5, %v246
    %v248 = vmul.f32 %v243, %v247
    %vm249 = vweird.f32 %v103
    %vm250 = vweird.f32 %v243
    %vm251 = vmor %vm249, %vm250
    %v252 = vsel %vm251, %v243, %v248
    %v253 = vrsqrt.pop %v104
    %v254 = vmul.f32 %v253, %v104
    %v255 = vmul.f32 %v254, %v253
    %v256 = vmul.f32 0.5, %v255
    %v257 = vsub.f32 1.5, %v256
    %v258 = vmul.f32 %v253, %v257
    %vm259 = vweird.f32 %v104
    %vm260 = vweird.f32 %v253
    %vm261 = vmor %vm259, %vm260
    %v262 = vsel %vm261, %v253, %v258
    %v263 = vrsqrt.pop %v105
    %v264 = vmul.f32 %v263, %v105
    %v265 = vmul.f32 %v264, %v263
    %v266 = vmul.f32 0.5, %v265
    %v267 = vsub.f32 1.5, %v266
    %v268 = vmul.f32 %v263, %v267
    %vm269 = vweird.f32 %v105
    %vm270 = vweird.f32 %v263
    %vm271 = vmor %vm269, %vm270
    %v272 = vsel %vm271, %v263, %v268
    %v273 = vrsqrt.pop %v106
    %v274 = vmul.f32 %v273, %v106
    %v275 = vmul.f32 %v274, %v273
    %v276 = vmul.f32 0.5, %v275
    %v277 = vsub.f32 1.5, %v276
    %v278 = vmul.f32 %v273, %v277
    %vm279 = vweird.f32 %v106
    %vm280 = vweird.f32 %v273
    %vm281 = vmor %vm279, %vm280
    %v282 = vsel %vm281, %v273, %v278
    %v283 = vmul.f32 %v118, 1.442695
    %v284 = vpow.pop %v283
    %v285 = vmul.f32 %v130, 1.442695
    %v286 = vpow.pop %v285
    %v287 = vmul.f32 %v142, 1.442695
    %v288 = vpow.pop %v287
    %v289 = vmul.f32 %v154, 1.442695
    %v290 = vpow.pop %v289
    %v291 = vmul.f32 %v166, 1.442695
    %v292 = vpow.pop %v291
    %v293 = vmul.f32 %v178, 1.442695
    %v294 = vpow.pop %v293
    %v295 = vmul.f32 %v190, 1.442695
    %v296 = vpow.pop %v295
    %v297 = vmul.f32 %v202, 1.442695
    %v298 = vpow.pop %v297
    %v299 = vsub.f32 0.0, %v118
    %v300 = vsub.f32 0.0, %v130
    %v301 = vsub.f32 0.0, %v142
    %v302 = vsub.f32 0.0, %v154
    %v303 = vsub.f32 0.0, %v166
    %v304 = vsub.f32 0.0, %v178
    %v305 = vsub.f32 0.0, %v190
    %v306 = vsub.f32 0.0, %v202
    %v307 = vmul.f32 %v299, 1.442695
    %v308 = vpow.pop %v307
    %v309 = vmul.f32 %v300, 1.442695
    %v310 = vpow.pop %v309
    %v311 = vmul.f32 %v301, 1.442695
    %v312 = vpow.pop %v311
    %v313 = vmul.f32 %v302, 1.442695
    %v314 = vpow.pop %v313
    %v315 = vmul.f32 %v303, 1.442695
    %v316 = vpow.pop %v315
    %v317 = vmul.f32 %v304, 1.442695
    %v318 = vpow.pop %v317
    %v319 = vmul.f32 %v305, 1.442695
    %v320 = vpow.pop %v319
    %v321 = vmul.f32 %v306, 1.442695
    %v322 = vpow.pop %v321
    %v323 = vadd.f32 %v284, %v308
    %v324 = vadd.f32 %v286, %v310
    %v325 = vadd.f32 %v288, %v312
    %v326 = vadd.f32 %v290, %v314
    %v327 = vadd.f32 %v292, %v316
    %v328 = vadd.f32 %v294, %v318
    %v329 = vadd.f32 %v296, %v320
    %v330 = vadd.f32 %v298, %v322
    %v331 = vmul.f32 %v323, 0.5
    %v332 = vmul.f32 %v324, 0.5
    %v333 = vmul.f32 %v325, 0.5
    %v334 = vmul.f32 %v326, 0.5
    %v335 = vmul.f32 %v327, 0.5
    %v336 = vmul.f32 %v328, 0.5
    %v337 = vmul.f32 %v329, 0.5
    %v338 = vmul.f32 %v330, 0.5
    %v339 = vsub.f32 %v284, %v308
    %v340 = vsub.f32 %v286, %v310
    %v341 = vsub.f32 %v288, %v312
    %v342 = vsub.f32 %v290, %v314
    %v343 = vsub.f32 %v292, %v316
    %v344 = vsub.f32 %v294, %v318
    %v345 = vsub.f32 %v296, %v320
    %v346 = vsub.f32 %v298, %v322
    %v347 = vmul.f32 %v339, 0.5
    %v348 = vmul.f32 %v340, 0.5
    %v349 = vmul.f32 %v341, 0.5
    %v350 = vmul.f32 %v342, 0.5
    %v351 = vmul.f32 %v343, 0.5
    %v352 = vmul.f32 %v344, 0.5
    %v353 = vmul.f32 %v345, 0.5
    %v354 = vmul.f32 %v346, 0.5
    %v355 = vmul.f32 %v347, %v212
    %v356 = vmul.f32 %v348, %v222
    %v357 = vmul.f32 %v349, %v232
    %v358 = vmul.f32 %v350, %v242
    %v359 = vmul.f32 %v351, %v252
    %v360 = vmul.f32 %v352, %v262
    %v361 = vmul.f32 %v353, %v272
    %v362 = vmul.f32 %v354, %v282
    %v363 = vmul.f32 %v355, %v58
    %v364 = vmul.f32 %v356, %v59
    %v365 = vmul.f32 %v357, %v60
    %v366 = vmul.f32 %v358, %v61
    %v367 = vmul.f32 %v359, %v62
    %v368 = vmul.f32 %v360, %v63
    %v369 = vmul.f32 %v361, %v64
    %v370 = vmul.f32 %v362, %v65
    %v371 = vld [vmem:[%s2] sm:$0x1]
    %v372 = vld [vmem:[%s3] sm:$0xff]
    %v373 = vld [vmem:[%s3 + $0x8] sm:$0xff]
    %v374 = vld [vmem:[%s3 + $0x10] sm:$0xff]
    %v375 = vld [vmem:[%s3 + $0x18] sm:$0x7f]
    %v376 = vld [vmem:[%s4] sm:$0x1]
    %v378 = vperm.slane %v371, 0
    %v380 = vmul.f32 %v331, %v378
    %v381 = vmul.f32 %v332, %v378
    %v382 = vmul.f32 %v333, %v378
    %v383 = vmul.f32 %v334, %v378
    %v384 = vmul.f32 %v335, %v378
    %v385 = vmul.f32 %v336, %v378
    %v386 = vmul.f32 %v337, %v378
    %v387 = vmul.f32 %v338, %v378
    %v388 = vpack.c.bf16 %v364, %v363
    %v389 = vpack.c.bf16 %v366, %v365
    %v390 = vpack.c.bf16 %v368, %v367
    %v391 = vpack.c.bf16 %v370, %v369
    %v392 = vpack.c.bf16 %v373, %v372
    %v393 = vpack.c.bf16 %v375, %v374
    %v395 = vsel %vm74, %v388, 0
    %v398 = vsel %vm74, %v389, 0
    %v401 = vsel %vm74, %v390, 0
    %v404 = vsel %vm74, %v391, 0
    %vm406 = vcmask 1046528
    %vm407 = vcmask 1047552
    %v408 = vsel %vm406, 4294967295, 65535
    %v409 = vsel %vm407, %v408, 0
    %v411 = vand.u32 %v393, %v409
    %413 = vmatpush.bf16.msra.mxu0 0
    %414 = vmatpush.bf16.msra.mxu0 0
    %415 = vmatpush.bf16.msra.mxu0 0
    %416 = vmatpush.bf16.msra.mxu0 0
    %417 = vmatpush.bf16.msra.mxu0 0
    %418 = vmatpush.bf16.msra.mxu0 0
    %419 = vmatpush.bf16.msra.mxu0 %v411
    %420 = vmatpush.bf16.msra.mxu0 %v392
    %421 = vmatmul.bf16.gmra.mxu0 %v395
    %v422 = vpop.f32.mrf.mxu0
    %v423 = vadd.f32 0.0, %v422
    %v424 = vpop.f32.mrf.mxu0
    %v425 = vadd.f32 0.0, %v424
    %426 = vmatmul.bf16.gmra.mxu0 %v398
    %v427 = vpop.f32.mrf.mxu0
    %v428 = vadd.f32 0.0, %v427
    %v429 = vpop.f32.mrf.mxu0
    %v430 = vadd.f32 0.0, %v429
    %431 = vmatmul.bf16.gmra.mxu0 %v401
    %v432 = vpop.f32.mrf.mxu0
    %v433 = vadd.f32 0.0, %v432
    %v434 = vpop.f32.mrf.mxu0
    %v435 = vadd.f32 0.0, %v434
    %436 = vmatmul.bf16.gmra.mxu0 %v404
    %v437 = vpop.f32.mrf.mxu0
    %v438 = vadd.f32 0.0, %v437
    %v439 = vpop.f32.mrf.mxu0
    %v440 = vadd.f32 0.0, %v439
    %441 = vdwg.mxu0
    %v442 = vadd.f32 %v380, %v423
    %v443 = vadd.f32 %v381, %v425
    %v444 = vadd.f32 %v382, %v428
    %v445 = vadd.f32 %v383, %v430
    %v446 = vadd.f32 %v384, %v433
    %v447 = vadd.f32 %v385, %v435
    %v448 = vadd.f32 %v386, %v438
    %v449 = vadd.f32 %v387, %v440
    %v451 = vperm.slane %v376, 0
    %v453 = vadd.f32 %v442, %v451
    %v454 = vadd.f32 %v443, %v451
    %v455 = vadd.f32 %v444, %v451
    %v456 = vadd.f32 %v445, %v451
    %v457 = vadd.f32 %v446, %v451
    %v458 = vadd.f32 %v447, %v451
    %v459 = vadd.f32 %v448, %v451
    %v460 = vadd.f32 %v449, %v451
    %v461 = vlaneseq
    %v462 = vand.u32 %v461, 127
    %vm463 = vcmp.eq.s32.totalorder %v462, 0
    %v464 = vmul.f32 %v453, %v453
    %v465 = vmul.f32 %v454, %v454
    %v466 = vmul.f32 %v455, %v455
    %v467 = vmul.f32 %v456, %v456
    %v468 = vmul.f32 %v457, %v457
    %v469 = vmul.f32 %v458, %v458
    %v470 = vmul.f32 %v459, %v459
    %v471 = vmul.f32 %v460, %v460
    %vm472 = vcmask 261120
    %v473 = vsel %vm472, %v464, 0.0
    %474 = vadd.xlane.f32.xlu0 %v473
    %v475 = vpop.xlane.xlu0 %474
    %v476 = vsel %vm472, %v465, 0.0
    %477 = vadd.xlane.f32.xlu0 %v476
    %v478 = vpop.xlane.xlu0 %477
    %v479 = vsel %vm472, %v466, 0.0
    %480 = vadd.xlane.f32.xlu0 %v479
    %v481 = vpop.xlane.xlu0 %480
    %v482 = vsel %vm472, %v467, 0.0
    %483 = vadd.xlane.f32.xlu0 %v482
    %v484 = vpop.xlane.xlu0 %483
    %v485 = vsel %vm472, %v468, 0.0
    %486 = vadd.xlane.f32.xlu0 %v485
    %v487 = vpop.xlane.xlu0 %486
    %v488 = vsel %vm472, %v469, 0.0
    %489 = vadd.xlane.f32.xlu0 %v488
    %v490 = vpop.xlane.xlu0 %489
    %v491 = vsel %vm472, %v470, 0.0
    %492 = vadd.xlane.f32.xlu0 %v491
    %v493 = vpop.xlane.xlu0 %492
    %v494 = vsel %vm472, %v471, 0.0
    %495 = vadd.xlane.f32.xlu0 %v494
    %v496 = vpop.xlane.xlu0 %495
    %v497 = vsub.f32 %v475, %v464
    %v498 = vsub.f32 %v478, %v465
    %v499 = vsub.f32 %v481, %v466
    %v500 = vsub.f32 %v484, %v467
    %v501 = vsub.f32 %v487, %v468
    %v502 = vsub.f32 %v490, %v469
    %v503 = vsub.f32 %v493, %v470
    %v504 = vsub.f32 %v496, %v471
    %v505 = vmax.f32 %v497, 1e-08
    %v506 = vmax.f32 %v498, 1e-08
    %v507 = vmax.f32 %v499, 1e-08
    %v508 = vmax.f32 %v500, 1e-08
    %v509 = vmax.f32 %v501, 1e-08
    %v510 = vmax.f32 %v502, 1e-08
    %v511 = vmax.f32 %v503, 1e-08
    %v512 = vmax.f32 %v504, 1e-08
    %v513 = vmul.f32 %v453, 0.5
    %v514 = vmul.f32 %v454, 0.5
    %v515 = vmul.f32 %v455, 0.5
    %v516 = vmul.f32 %v456, 0.5
    %v517 = vmul.f32 %v457, 0.5
    %v518 = vmul.f32 %v458, 0.5
    %v519 = vmul.f32 %v459, 0.5
    %v520 = vmul.f32 %v460, 0.5
    %v521 = vtanh.pop %v513
    %v522 = vtanh.pop %v514
    %v523 = vtanh.pop %v515
    %v524 = vtanh.pop %v516
    %v525 = vtanh.pop %v517
    %v526 = vtanh.pop %v518
    %v527 = vtanh.pop %v519
    %v528 = vtanh.pop %v520
    %v529 = vadd.f32 %v521, 1.0
    %v530 = vadd.f32 %v522, 1.0
    %v531 = vadd.f32 %v523, 1.0
    %v532 = vadd.f32 %v524, 1.0
    %v533 = vadd.f32 %v525, 1.0
    %v534 = vadd.f32 %v526, 1.0
    %v535 = vadd.f32 %v527, 1.0
    %v536 = vadd.f32 %v528, 1.0
    %v537 = vmul.f32 %v529, 0.5
    %v538 = vmul.f32 %v530, 0.5
    %v539 = vmul.f32 %v531, 0.5
    %v540 = vmul.f32 %v532, 0.5
    %v541 = vmul.f32 %v533, 0.5
    %v542 = vmul.f32 %v534, 0.5
    %v543 = vmul.f32 %v535, 0.5
    %v544 = vmul.f32 %v536, 0.5
    %v545 = vmul.f32 %v537, 10.0
    %v546 = vmul.f32 %v538, 10.0
    %v547 = vmul.f32 %v539, 10.0
    %v548 = vmul.f32 %v540, 10.0
    %v549 = vmul.f32 %v541, 10.0
    %v550 = vmul.f32 %v542, 10.0
    %v551 = vmul.f32 %v543, 10.0
    %v552 = vmul.f32 %v544, 10.0
    %v553 = vadd.f32 %v545, 1.5
    %v554 = vadd.f32 %v546, 1.5
    %v555 = vadd.f32 %v547, 1.5
    %v556 = vadd.f32 %v548, 1.5
    %v557 = vadd.f32 %v549, 1.5
    %v558 = vadd.f32 %v550, 1.5
    %v559 = vadd.f32 %v551, 1.5
    %v560 = vadd.f32 %v552, 1.5
    %v561 = vmul.f32 %v553, %v553
    %v562 = vmul.f32 %v554, %v554
    %v563 = vmul.f32 %v555, %v555
    %v564 = vmul.f32 %v556, %v556
    %v565 = vmul.f32 %v557, %v557
    %v566 = vmul.f32 %v558, %v558
    %v567 = vmul.f32 %v559, %v559
    %v568 = vmul.f32 %v560, %v560
    %v569 = vsub.f32 %v561, 1.0
    %v570 = vsub.f32 %v562, 1.0
    %v571 = vsub.f32 %v563, 1.0
    %v572 = vsub.f32 %v564, 1.0
    %v573 = vsub.f32 %v565, 1.0
    %v574 = vsub.f32 %v566, 1.0
    %v575 = vsub.f32 %v567, 1.0
    %v576 = vsub.f32 %v568, 1.0
    %v577 = vrsqrt.pop %v569
    %v578 = vmul.f32 %v577, %v569
    %v579 = vmul.f32 %v578, %v577
    %v580 = vmul.f32 0.5, %v579
    %v581 = vsub.f32 1.5, %v580
    %v582 = vmul.f32 %v577, %v581
    %v583 = vmul.f32 %v569, %v582
    %vm584 = vcmp.eq.f32.partialorder %v569, inf
    %v585 = vsel %vm584, %v569, %v583
    %vm586 = vcmp.eq.f32.partialorder %v569, 0.0
    %v587 = vand.u32 %v569, 2147483648
    %v588 = vsel %vm586, %v587, %v585
    %v589 = vrsqrt.pop %v570
    %v590 = vmul.f32 %v589, %v570
    %v591 = vmul.f32 %v590, %v589
    %v592 = vmul.f32 0.5, %v591
    %v593 = vsub.f32 1.5, %v592
    %v594 = vmul.f32 %v589, %v593
    %v595 = vmul.f32 %v570, %v594
    %vm596 = vcmp.eq.f32.partialorder %v570, inf
    %v597 = vsel %vm596, %v570, %v595
    %vm598 = vcmp.eq.f32.partialorder %v570, 0.0
    %v599 = vand.u32 %v570, 2147483648
    %v600 = vsel %vm598, %v599, %v597
    %v601 = vrsqrt.pop %v571
    %v602 = vmul.f32 %v601, %v571
    %v603 = vmul.f32 %v602, %v601
    %v604 = vmul.f32 0.5, %v603
    %v605 = vsub.f32 1.5, %v604
    %v606 = vmul.f32 %v601, %v605
    %v607 = vmul.f32 %v571, %v606
    %vm608 = vcmp.eq.f32.partialorder %v571, inf
    %v609 = vsel %vm608, %v571, %v607
    %vm610 = vcmp.eq.f32.partialorder %v571, 0.0
    %v611 = vand.u32 %v571, 2147483648
    %v612 = vsel %vm610, %v611, %v609
    %v613 = vrsqrt.pop %v572
    %v614 = vmul.f32 %v613, %v572
    %v615 = vmul.f32 %v614, %v613
    %v616 = vmul.f32 0.5, %v615
    %v617 = vsub.f32 1.5, %v616
    %v618 = vmul.f32 %v613, %v617
    %v619 = vmul.f32 %v572, %v618
    %vm620 = vcmp.eq.f32.partialorder %v572, inf
    %v621 = vsel %vm620, %v572, %v619
    %vm622 = vcmp.eq.f32.partialorder %v572, 0.0
    %v623 = vand.u32 %v572, 2147483648
    %v624 = vsel %vm622, %v623, %v621
    %v625 = vrsqrt.pop %v573
    %v626 = vmul.f32 %v625, %v573
    %v627 = vmul.f32 %v626, %v625
    %v628 = vmul.f32 0.5, %v627
    %v629 = vsub.f32 1.5, %v628
    %v630 = vmul.f32 %v625, %v629
    %v631 = vmul.f32 %v573, %v630
    %vm632 = vcmp.eq.f32.partialorder %v573, inf
    %v633 = vsel %vm632, %v573, %v631
    %vm634 = vcmp.eq.f32.partialorder %v573, 0.0
    %v635 = vand.u32 %v573, 2147483648
    %v636 = vsel %vm634, %v635, %v633
    %v637 = vrsqrt.pop %v574
    %v638 = vmul.f32 %v637, %v574
    %v639 = vmul.f32 %v638, %v637
    %v640 = vmul.f32 0.5, %v639
    %v641 = vsub.f32 1.5, %v640
    %v642 = vmul.f32 %v637, %v641
    %v643 = vmul.f32 %v574, %v642
    %vm644 = vcmp.eq.f32.partialorder %v574, inf
    %v645 = vsel %vm644, %v574, %v643
    %vm646 = vcmp.eq.f32.partialorder %v574, 0.0
    %v647 = vand.u32 %v574, 2147483648
    %v648 = vsel %vm646, %v647, %v645
    %v649 = vrsqrt.pop %v575
    %v650 = vmul.f32 %v649, %v575
    %v651 = vmul.f32 %v650, %v649
    %v652 = vmul.f32 0.5, %v651
    %v653 = vsub.f32 1.5, %v652
    %v654 = vmul.f32 %v649, %v653
    %v655 = vmul.f32 %v575, %v654
    %vm656 = vcmp.eq.f32.partialorder %v575, inf
    %v657 = vsel %vm656, %v575, %v655
    %vm658 = vcmp.eq.f32.partialorder %v575, 0.0
    %v659 = vand.u32 %v575, 2147483648
    %v660 = vsel %vm658, %v659, %v657
    %v661 = vrsqrt.pop %v576
    %v662 = vmul.f32 %v661, %v576
    %v663 = vmul.f32 %v662, %v661
    %v664 = vmul.f32 0.5, %v663
    %v665 = vsub.f32 1.5, %v664
    %v666 = vmul.f32 %v661, %v665
    %v667 = vmul.f32 %v576, %v666
    %vm668 = vcmp.eq.f32.partialorder %v576, inf
    %v669 = vsel %vm668, %v576, %v667
    %vm670 = vcmp.eq.f32.partialorder %v576, 0.0
    %v671 = vand.u32 %v576, 2147483648
    %v672 = vsel %vm670, %v671, %v669
    %v673 = vrsqrt.pop %v505
    %v674 = vmul.f32 %v673, %v505
    %v675 = vmul.f32 %v674, %v673
    %v676 = vmul.f32 0.5, %v675
    %v677 = vsub.f32 1.5, %v676
    %v678 = vmul.f32 %v673, %v677
    %vm679 = vweird.f32 %v505
    %vm680 = vweird.f32 %v673
    %vm681 = vmor %vm679, %vm680
    %v682 = vsel %vm681, %v673, %v678
    %v683 = vrsqrt.pop %v506
    %v684 = vmul.f32 %v683, %v506
    %v685 = vmul.f32 %v684, %v683
    %v686 = vmul.f32 0.5, %v685
    %v687 = vsub.f32 1.5, %v686
    %v688 = vmul.f32 %v683, %v687
    %vm689 = vweird.f32 %v506
    %vm690 = vweird.f32 %v683
    %vm691 = vmor %vm689, %vm690
    %v692 = vsel %vm691, %v683, %v688
    %v693 = vrsqrt.pop %v507
    %v694 = vmul.f32 %v693, %v507
    %v695 = vmul.f32 %v694, %v693
    %v696 = vmul.f32 0.5, %v695
    %v697 = vsub.f32 1.5, %v696
    %v698 = vmul.f32 %v693, %v697
    %vm699 = vweird.f32 %v507
    %vm700 = vweird.f32 %v693
    %vm701 = vmor %vm699, %vm700
    %v702 = vsel %vm701, %v693, %v698
    %v703 = vrsqrt.pop %v508
    %v704 = vmul.f32 %v703, %v508
    %v705 = vmul.f32 %v704, %v703
    %v706 = vmul.f32 0.5, %v705
    %v707 = vsub.f32 1.5, %v706
    %v708 = vmul.f32 %v703, %v707
    %vm709 = vweird.f32 %v508
    %vm710 = vweird.f32 %v703
    %vm711 = vmor %vm709, %vm710
    %v712 = vsel %vm711, %v703, %v708
    %v713 = vrsqrt.pop %v509
    %v714 = vmul.f32 %v713, %v509
    %v715 = vmul.f32 %v714, %v713
    %v716 = vmul.f32 0.5, %v715
    %v717 = vsub.f32 1.5, %v716
    %v718 = vmul.f32 %v713, %v717
    %vm719 = vweird.f32 %v509
    %vm720 = vweird.f32 %v713
    %vm721 = vmor %vm719, %vm720
    %v722 = vsel %vm721, %v713, %v718
    %v723 = vrsqrt.pop %v510
    %v724 = vmul.f32 %v723, %v510
    %v725 = vmul.f32 %v724, %v723
    %v726 = vmul.f32 0.5, %v725
    %v727 = vsub.f32 1.5, %v726
    %v728 = vmul.f32 %v723, %v727
    %vm729 = vweird.f32 %v510
    %vm730 = vweird.f32 %v723
    %vm731 = vmor %vm729, %vm730
    %v732 = vsel %vm731, %v723, %v728
    %v733 = vrsqrt.pop %v511
    %v734 = vmul.f32 %v733, %v511
    %v735 = vmul.f32 %v734, %v733
    %v736 = vmul.f32 0.5, %v735
    %v737 = vsub.f32 1.5, %v736
    %v738 = vmul.f32 %v733, %v737
    %vm739 = vweird.f32 %v511
    %vm740 = vweird.f32 %v733
    %vm741 = vmor %vm739, %vm740
    %v742 = vsel %vm741, %v733, %v738
    %v743 = vrsqrt.pop %v512
    %v744 = vmul.f32 %v743, %v512
    %v745 = vmul.f32 %v744, %v743
    %v746 = vmul.f32 0.5, %v745
    %v747 = vsub.f32 1.5, %v746
    %v748 = vmul.f32 %v743, %v747
    %vm749 = vweird.f32 %v512
    %vm750 = vweird.f32 %v743
    %vm751 = vmor %vm749, %vm750
    %v752 = vsel %vm751, %v743, %v748
    %v753 = vmul.f32 %v588, %v682
    %v754 = vmul.f32 %v600, %v692
    %v755 = vmul.f32 %v612, %v702
    %v756 = vmul.f32 %v624, %v712
    %v757 = vmul.f32 %v636, %v722
    %v758 = vmul.f32 %v648, %v732
    %v759 = vmul.f32 %v660, %v742
    %v760 = vmul.f32 %v672, %v752
    %v761 = vmax.f32 %v753, 0.0001
    %v762 = vmax.f32 %v754, 0.0001
    %v763 = vmax.f32 %v755, 0.0001
    %v764 = vmax.f32 %v756, 0.0001
    %v765 = vmax.f32 %v757, 0.0001
    %v766 = vmax.f32 %v758, 0.0001
    %v767 = vmax.f32 %v759, 0.0001
    %v768 = vmax.f32 %v760, 0.0001
    %770 = vset.pattern.permute.xlu0 0
    %771 = vperm.xlu0 %770, %v761
    %v772 = vpop.permute.xlu0 %771
    %775 = vset.pattern.permute.xlu0 0
    %776 = vperm.xlu0 %775, %v762
    %v777 = vpop.permute.xlu0 %776
    %780 = vset.pattern.permute.xlu0 0
    %781 = vperm.xlu0 %780, %v763
    %v782 = vpop.permute.xlu0 %781
    %785 = vset.pattern.permute.xlu0 0
    %786 = vperm.xlu0 %785, %v764
    %v787 = vpop.permute.xlu0 %786
    %790 = vset.pattern.permute.xlu0 0
    %791 = vperm.xlu0 %790, %v765
    %v792 = vpop.permute.xlu0 %791
    %795 = vset.pattern.permute.xlu0 0
    %796 = vperm.xlu0 %795, %v766
    %v797 = vpop.permute.xlu0 %796
    %800 = vset.pattern.permute.xlu0 0
    %801 = vperm.xlu0 %800, %v767
    %v802 = vpop.permute.xlu0 %801
    %805 = vset.pattern.permute.xlu0 0
    %806 = vperm.xlu0 %805, %v768
    %v807 = vpop.permute.xlu0 %806
    %v809 = vmul.f32 %v453, %v772
    %v810 = vmul.f32 %v454, %v777
    %v811 = vmul.f32 %v455, %v782
    %v812 = vmul.f32 %v456, %v787
    %v813 = vmul.f32 %v457, %v792
    %v814 = vmul.f32 %v458, %v797
    %v815 = vmul.f32 %v459, %v802
    %v816 = vmul.f32 %v460, %v807
    %818 = vset.pattern.permute.xlu0 0
    %819 = vperm.xlu0 %818, %v553
    %v820 = vpop.permute.xlu0 %819
    %823 = vset.pattern.permute.xlu0 0
    %824 = vperm.xlu0 %823, %v554
    %v825 = vpop.permute.xlu0 %824
    %828 = vset.pattern.permute.xlu0 0
    %829 = vperm.xlu0 %828, %v555
    %v830 = vpop.permute.xlu0 %829
    %833 = vset.pattern.permute.xlu0 0
    %834 = vperm.xlu0 %833, %v556
    %v835 = vpop.permute.xlu0 %834
    %838 = vset.pattern.permute.xlu0 0
    %839 = vperm.xlu0 %838, %v557
    %v840 = vpop.permute.xlu0 %839
    %843 = vset.pattern.permute.xlu0 0
    %844 = vperm.xlu0 %843, %v558
    %v845 = vpop.permute.xlu0 %844
    %848 = vset.pattern.permute.xlu0 0
    %849 = vperm.xlu0 %848, %v559
    %v850 = vpop.permute.xlu0 %849
    %853 = vset.pattern.permute.xlu0 0
    %854 = vperm.xlu0 %853, %v560
    %v855 = vpop.permute.xlu0 %854
    %v857 = vsel %vm463, %v820, %v809
    %v858 = vsel %vm463, %v825, %v810
    %v859 = vsel %vm463, %v830, %v811
    %v860 = vsel %vm463, %v835, %v812
    %v861 = vsel %vm463, %v840, %v813
    %v862 = vsel %vm463, %v845, %v814
    %v863 = vsel %vm463, %v850, %v815
    %v864 = vsel %vm463, %v855, %v816
    %v865 = vpack.c.bf16 %v858, %v857
    %v866 = vpack.c.bf16 %v860, %v859
    %v867 = vpack.c.bf16 %v862, %v861
    %v868 = vpack.c.bf16 %v864, %v863
    %v877 = vunpack.c.l.b16 %v50
    %v878 = vunpack.c.l.b16 %v51
    %v879 = vunpack.c.l.b16 %v52
    %v880 = vunpack.c.l.b16 %v53
    %v881 = vunpack.c.l.b16 %v54
    %v882 = vunpack.c.l.b16 %v55
    %v883 = vunpack.c.l.b16 %v56
    %v884 = vunpack.c.l.b16 %v57
    %v885 = vpack.c.b16 %v878, %v877
    %v886 = vpack.c.b16 %v880, %v879
    %v887 = vpack.c.b16 %v882, %v881
    %v888 = vpack.c.b16 %v884, %v883
    %vm889 = vcmask 523264
    %v891 = vsel %vm889, %v885, 0
    %v894 = vsel %vm889, %v886, 0
    %v897 = vsel %vm889, %v887, 0
    %v900 = vsel %vm889, %v888, 0
    %902 = vmatpush.bf16.msra.mxu0 0
    %903 = vmatpush.bf16.msra.mxu0 0
    %904 = vmatpush.bf16.msra.mxu0 0
    %905 = vmatpush.bf16.msra.mxu0 0
    %906 = vmatpush.bf16.msra.mxu0 %v868
    %907 = vmatpush.bf16.msra.mxu0 %v867
    %908 = vmatpush.bf16.msra.mxu0 %v866
    %909 = vmatpush.bf16.msra.mxu0 %v865
    %910 = vmatmul.bf16.gmra.mxu0 %v891
    %v911 = vpop.f32.mrf.mxu0
    %v912 = vadd.f32 0.0, %v911
    %v913 = vpop.f32.mrf.mxu0
    %v914 = vadd.f32 0.0, %v913
    %915 = vmatmul.bf16.gmra.mxu0 %v894
    %v916 = vpop.f32.mrf.mxu0
    %v917 = vadd.f32 0.0, %v916
    %v918 = vpop.f32.mrf.mxu0
    %v919 = vadd.f32 0.0, %v918
    %920 = vmatmul.bf16.gmra.mxu0 %v897
    %v921 = vpop.f32.mrf.mxu0
    %v922 = vadd.f32 0.0, %v921
    %v923 = vpop.f32.mrf.mxu0
    %v924 = vadd.f32 0.0, %v923
    %925 = vmatmul.bf16.gmra.mxu0 %v900
    %v926 = vpop.f32.mrf.mxu0
    %v927 = vadd.f32 0.0, %v926
    %v928 = vpop.f32.mrf.mxu0
    %v929 = vadd.f32 0.0, %v928
    %930 = vdwg.mxu0
    %v931 = vmul.f32 %v912, %v912
    %v932 = vmul.f32 %v914, %v914
    %v933 = vmul.f32 %v917, %v917
    %v934 = vmul.f32 %v919, %v919
    %v935 = vmul.f32 %v922, %v922
    %v936 = vmul.f32 %v924, %v924
    %v937 = vmul.f32 %v927, %v927
    %v938 = vmul.f32 %v929, %v929
    %v939 = vsel %vm472, %v931, 0.0
    %940 = vadd.xlane.f32.xlu0 %v939
    %v941 = vpop.xlane.xlu0 %940
    %v942 = vsel %vm472, %v932, 0.0
    %943 = vadd.xlane.f32.xlu0 %v942
    %v944 = vpop.xlane.xlu0 %943
    %v945 = vsel %vm472, %v933, 0.0
    %946 = vadd.xlane.f32.xlu0 %v945
    %v947 = vpop.xlane.xlu0 %946
    %v948 = vsel %vm472, %v934, 0.0
    %949 = vadd.xlane.f32.xlu0 %v948
    %v950 = vpop.xlane.xlu0 %949
    %v951 = vsel %vm472, %v935, 0.0
    %952 = vadd.xlane.f32.xlu0 %v951
    %v953 = vpop.xlane.xlu0 %952
    %v954 = vsel %vm472, %v936, 0.0
    %955 = vadd.xlane.f32.xlu0 %v954
    %v956 = vpop.xlane.xlu0 %955
    %v957 = vsel %vm472, %v937, 0.0
    %958 = vadd.xlane.f32.xlu0 %v957
    %v959 = vpop.xlane.xlu0 %958
    %v960 = vsel %vm472, %v938, 0.0
    %961 = vadd.xlane.f32.xlu0 %v960
    %v962 = vpop.xlane.xlu0 %961
    %v963 = vmul.f32 %v912, 2.0
    %v964 = vmul.f32 %v914, 2.0
    %v965 = vmul.f32 %v917, 2.0
    %v966 = vmul.f32 %v919, 2.0
    %v967 = vmul.f32 %v922, 2.0
    %v968 = vmul.f32 %v924, 2.0
    %v969 = vmul.f32 %v927, 2.0
    %v970 = vmul.f32 %v929, 2.0
    %v971 = vmul.f32 %v963, %v912
    %v972 = vmul.f32 %v964, %v914
    %v973 = vmul.f32 %v965, %v917
    %v974 = vmul.f32 %v966, %v919
    %v975 = vmul.f32 %v967, %v922
    %v976 = vmul.f32 %v968, %v924
    %v977 = vmul.f32 %v969, %v927
    %v978 = vmul.f32 %v970, %v929
    %v979 = vsub.f32 %v971, %v941
    %v980 = vsub.f32 %v972, %v944
    %v981 = vsub.f32 %v973, %v947
    %v982 = vsub.f32 %v974, %v950
    %v983 = vsub.f32 %v975, %v953
    %v984 = vsub.f32 %v976, %v956
    %v985 = vsub.f32 %v977, %v959
    %v986 = vsub.f32 %v978, %v962
    %v987 = vand.u32 2147483647, %v979
    %v988 = vand.u32 2147483647, %v980
    %v989 = vand.u32 2147483647, %v981
    %v990 = vand.u32 2147483647, %v982
    %v991 = vand.u32 2147483647, %v983
    %v992 = vand.u32 2147483647, %v984
    %v993 = vand.u32 2147483647, %v985
    %v994 = vand.u32 2147483647, %v986
    %v995 = vmax.f32 %v987, 1e-08
    %v996 = vmax.f32 %v988, 1e-08
    %v997 = vmax.f32 %v989, 1e-08
    %v998 = vmax.f32 %v990, 1e-08
    %v999 = vmax.f32 %v991, 1e-08
    %v1000 = vmax.f32 %v992, 1e-08
    %v1001 = vmax.f32 %v993, 1e-08
    %v1002 = vmax.f32 %v994, 1e-08
    %v1003 = vrsqrt.pop %v995
    %v1004 = vmul.f32 %v1003, %v995
    %v1005 = vmul.f32 %v1004, %v1003
    %v1006 = vmul.f32 0.5, %v1005
    %v1007 = vsub.f32 1.5, %v1006
    %v1008 = vmul.f32 %v1003, %v1007
    %vm1009 = vweird.f32 %v995
    %vm1010 = vweird.f32 %v1003
    %vm1011 = vmor %vm1009, %vm1010
    %v1012 = vsel %vm1011, %v1003, %v1008
    %v1013 = vrsqrt.pop %v996
    %v1014 = vmul.f32 %v1013, %v996
    %v1015 = vmul.f32 %v1014, %v1013
    %v1016 = vmul.f32 0.5, %v1015
    %v1017 = vsub.f32 1.5, %v1016
    %v1018 = vmul.f32 %v1013, %v1017
    %vm1019 = vweird.f32 %v996
    %vm1020 = vweird.f32 %v1013
    %vm1021 = vmor %vm1019, %vm1020
    %v1022 = vsel %vm1021, %v1013, %v1018
    %v1023 = vrsqrt.pop %v997
    %v1024 = vmul.f32 %v1023, %v997
    %v1025 = vmul.f32 %v1024, %v1023
    %v1026 = vmul.f32 0.5, %v1025
    %v1027 = vsub.f32 1.5, %v1026
    %v1028 = vmul.f32 %v1023, %v1027
    %vm1029 = vweird.f32 %v997
    %vm1030 = vweird.f32 %v1023
    %vm1031 = vmor %vm1029, %vm1030
    %v1032 = vsel %vm1031, %v1023, %v1028
    %v1033 = vrsqrt.pop %v998
    %v1034 = vmul.f32 %v1033, %v998
    %v1035 = vmul.f32 %v1034, %v1033
    %v1036 = vmul.f32 0.5, %v1035
    %v1037 = vsub.f32 1.5, %v1036
    %v1038 = vmul.f32 %v1033, %v1037
    %vm1039 = vweird.f32 %v998
    %vm1040 = vweird.f32 %v1033
    %vm1041 = vmor %vm1039, %vm1040
    %v1042 = vsel %vm1041, %v1033, %v1038
    %v1043 = vrsqrt.pop %v999
    %v1044 = vmul.f32 %v1043, %v999
    %v1045 = vmul.f32 %v1044, %v1043
    %v1046 = vmul.f32 0.5, %v1045
    %v1047 = vsub.f32 1.5, %v1046
    %v1048 = vmul.f32 %v1043, %v1047
    %vm1049 = vweird.f32 %v999
    %vm1050 = vweird.f32 %v1043
    %vm1051 = vmor %vm1049, %vm1050
    %v1052 = vsel %vm1051, %v1043, %v1048
    %v1053 = vrsqrt.pop %v1000
    %v1054 = vmul.f32 %v1053, %v1000
    %v1055 = vmul.f32 %v1054, %v1053
    %v1056 = vmul.f32 0.5, %v1055
    %v1057 = vsub.f32 1.5, %v1056
    %v1058 = vmul.f32 %v1053, %v1057
    %vm1059 = vweird.f32 %v1000
    %vm1060 = vweird.f32 %v1053
    %vm1061 = vmor %vm1059, %vm1060
    %v1062 = vsel %vm1061, %v1053, %v1058
    %v1063 = vrsqrt.pop %v1001
    %v1064 = vmul.f32 %v1063, %v1001
    %v1065 = vmul.f32 %v1064, %v1063
    %v1066 = vmul.f32 0.5, %v1065
    %v1067 = vsub.f32 1.5, %v1066
    %v1068 = vmul.f32 %v1063, %v1067
    %vm1069 = vweird.f32 %v1001
    %vm1070 = vweird.f32 %v1063
    %vm1071 = vmor %vm1069, %vm1070
    %v1072 = vsel %vm1071, %v1063, %v1068
    %v1073 = vrsqrt.pop %v1002
    %v1074 = vmul.f32 %v1073, %v1002
    %v1075 = vmul.f32 %v1074, %v1073
    %v1076 = vmul.f32 0.5, %v1075
    %v1077 = vsub.f32 1.5, %v1076
    %v1078 = vmul.f32 %v1073, %v1077
    %vm1079 = vweird.f32 %v1002
    %vm1080 = vweird.f32 %v1073
    %vm1081 = vmor %vm1079, %vm1080
    %v1082 = vsel %vm1081, %v1073, %v1078
    %1084 = vset.pattern.permute.xlu0 0
    %1085 = vperm.xlu0 %1084, %v1012
    %v1086 = vpop.permute.xlu0 %1085
    %1089 = vset.pattern.permute.xlu0 0
    %1090 = vperm.xlu0 %1089, %v1022
    %v1091 = vpop.permute.xlu0 %1090
    %1094 = vset.pattern.permute.xlu0 0
    %1095 = vperm.xlu0 %1094, %v1032
    %v1096 = vpop.permute.xlu0 %1095
    %1099 = vset.pattern.permute.xlu0 0
    %1100 = vperm.xlu0 %1099, %v1042
    %v1101 = vpop.permute.xlu0 %1100
    %1104 = vset.pattern.permute.xlu0 0
    %1105 = vperm.xlu0 %1104, %v1052
    %v1106 = vpop.permute.xlu0 %1105
    %1109 = vset.pattern.permute.xlu0 0
    %1110 = vperm.xlu0 %1109, %v1062
    %v1111 = vpop.permute.xlu0 %1110
    %1114 = vset.pattern.permute.xlu0 0
    %1115 = vperm.xlu0 %1114, %v1072
    %v1116 = vpop.permute.xlu0 %1115
    %1119 = vset.pattern.permute.xlu0 0
    %1120 = vperm.xlu0 %1119, %v1082
    %v1121 = vpop.permute.xlu0 %1120
    %v1123 = vmul.f32 %v912, %v1086
    %v1124 = vmul.f32 %v914, %v1091
    %v1125 = vmul.f32 %v917, %v1096
    %v1126 = vmul.f32 %v919, %v1101
    %v1127 = vmul.f32 %v922, %v1106
    %v1128 = vmul.f32 %v924, %v1111
    %v1129 = vmul.f32 %v927, %v1116
    %v1130 = vmul.f32 %v929, %v1121
    %v1131 = vld [vmem:[%s5] sm:$0xff]
    %v1132 = vld [vmem:[%s5 + $0x8] sm:$0xff]
    %v1133 = vld [vmem:[%s5 + $0x10] sm:$0xff]
    %v1134 = vld [vmem:[%s5 + $0x18] sm:$0xff]
    %v1135 = vld [vmem:[%s6] sm:$0x1]
    %v1136 = vmax.f32 %v1123, 0.0
    %v1137 = vmax.f32 %v1124, 0.0
    %v1138 = vmax.f32 %v1125, 0.0
    %v1139 = vmax.f32 %v1126, 0.0
    %v1140 = vmax.f32 %v1127, 0.0
    %v1141 = vmax.f32 %v1128, 0.0
    %v1142 = vmax.f32 %v1129, 0.0
    %v1143 = vmax.f32 %v1130, 0.0
    %v1144 = vpack.c.bf16 %v1137, %v1136
    %v1145 = vpack.c.bf16 %v1139, %v1138
    %v1146 = vpack.c.bf16 %v1141, %v1140
    %v1147 = vpack.c.bf16 %v1143, %v1142
    %v1148 = vpack.c.bf16 %v1132, %v1131
    %v1149 = vpack.c.bf16 %v1134, %v1133
    %v1151 = vperm.slane %v1135, 0
    %v1154 = vsel %vm472, %v1144, 0
    %v1157 = vsel %vm472, %v1145, 0
    %v1160 = vsel %vm472, %v1146, 0
    %v1163 = vsel %vm472, %v1147, 0
    %1165 = vmatpush.bf16.msra.mxu0 0
    %1166 = vmatpush.bf16.msra.mxu0 0
    %1167 = vmatpush.bf16.msra.mxu0 0
    %1168 = vmatpush.bf16.msra.mxu0 0
    %1169 = vmatpush.bf16.msra.mxu0 0
    %1170 = vmatpush.bf16.msra.mxu0 0
    %1171 = vmatpush.bf16.msra.mxu0 %v1149
    %1172 = vmatpush.bf16.msra.mxu0 %v1148
    %1173 = vmatmul.bf16.gmra.mxu0 %v1154
    %v1174 = vpop.f32.mrf.mxu0
    %v1175 = vadd.f32 %v1151, %v1174
    %v1176 = vpop.f32.mrf.mxu0
    %v1177 = vadd.f32 %v1151, %v1176
    %1178 = vmatmul.bf16.gmra.mxu0 %v1157
    %v1179 = vpop.f32.mrf.mxu0
    %v1180 = vadd.f32 %v1151, %v1179
    %v1181 = vpop.f32.mrf.mxu0
    %v1182 = vadd.f32 %v1151, %v1181
    %1183 = vmatmul.bf16.gmra.mxu0 %v1160
    %v1184 = vpop.f32.mrf.mxu0
    %v1185 = vadd.f32 %v1151, %v1184
    %v1186 = vpop.f32.mrf.mxu0
    %v1187 = vadd.f32 %v1151, %v1186
    %1188 = vmatmul.bf16.gmra.mxu0 %v1163
    %v1189 = vpop.f32.mrf.mxu0
    %v1190 = vadd.f32 %v1151, %v1189
    %v1191 = vpop.f32.mrf.mxu0
    %v1192 = vadd.f32 %v1151, %v1191
    %1193 = vdwg.mxu0
    %v1194 = vmul.f32 %v1175, %v1175
    %v1195 = vmul.f32 %v1177, %v1177
    %v1196 = vmul.f32 %v1180, %v1180
    %v1197 = vmul.f32 %v1182, %v1182
    %v1198 = vmul.f32 %v1185, %v1185
    %v1199 = vmul.f32 %v1187, %v1187
    %v1200 = vmul.f32 %v1190, %v1190
    %v1201 = vmul.f32 %v1192, %v1192
    %v1202 = vsel %vm472, %v1194, 0.0
    %1203 = vadd.xlane.f32.xlu0 %v1202
    %v1204 = vpop.xlane.xlu0 %1203
    %v1205 = vsel %vm472, %v1195, 0.0
    %1206 = vadd.xlane.f32.xlu0 %v1205
    %v1207 = vpop.xlane.xlu0 %1206
    %v1208 = vsel %vm472, %v1196, 0.0
    %1209 = vadd.xlane.f32.xlu0 %v1208
    %v1210 = vpop.xlane.xlu0 %1209
    %v1211 = vsel %vm472, %v1197, 0.0
    %1212 = vadd.xlane.f32.xlu0 %v1211
    %v1213 = vpop.xlane.xlu0 %1212
    %v1214 = vsel %vm472, %v1198, 0.0
    %1215 = vadd.xlane.f32.xlu0 %v1214
    %v1216 = vpop.xlane.xlu0 %1215
    %v1217 = vsel %vm472, %v1199, 0.0
    %1218 = vadd.xlane.f32.xlu0 %v1217
    %v1219 = vpop.xlane.xlu0 %1218
    %v1220 = vsel %vm472, %v1200, 0.0
    %1221 = vadd.xlane.f32.xlu0 %v1220
    %v1222 = vpop.xlane.xlu0 %1221
    %v1223 = vsel %vm472, %v1201, 0.0
    %1224 = vadd.xlane.f32.xlu0 %v1223
    %v1225 = vpop.xlane.xlu0 %1224
    %v1226 = vsub.f32 %v1204, %v1194
    %v1227 = vsub.f32 %v1207, %v1195
    %v1228 = vsub.f32 %v1210, %v1196
    %v1229 = vsub.f32 %v1213, %v1197
    %v1230 = vsub.f32 %v1216, %v1198
    %v1231 = vsub.f32 %v1219, %v1199
    %v1232 = vsub.f32 %v1222, %v1200
    %v1233 = vsub.f32 %v1225, %v1201
    %v1234 = vmax.f32 %v1226, 1e-08
    %v1235 = vmax.f32 %v1227, 1e-08
    %v1236 = vmax.f32 %v1228, 1e-08
    %v1237 = vmax.f32 %v1229, 1e-08
    %v1238 = vmax.f32 %v1230, 1e-08
    %v1239 = vmax.f32 %v1231, 1e-08
    %v1240 = vmax.f32 %v1232, 1e-08
    %v1241 = vmax.f32 %v1233, 1e-08
    %v1242 = vmul.f32 %v1175, 0.5
    %v1243 = vmul.f32 %v1177, 0.5
    %v1244 = vmul.f32 %v1180, 0.5
    %v1245 = vmul.f32 %v1182, 0.5
    %v1246 = vmul.f32 %v1185, 0.5
    %v1247 = vmul.f32 %v1187, 0.5
    %v1248 = vmul.f32 %v1190, 0.5
    %v1249 = vmul.f32 %v1192, 0.5
    %v1250 = vtanh.pop %v1242
    %v1251 = vtanh.pop %v1243
    %v1252 = vtanh.pop %v1244
    %v1253 = vtanh.pop %v1245
    %v1254 = vtanh.pop %v1246
    %v1255 = vtanh.pop %v1247
    %v1256 = vtanh.pop %v1248
    %v1257 = vtanh.pop %v1249
    %v1258 = vadd.f32 %v1250, 1.0
    %v1259 = vadd.f32 %v1251, 1.0
    %v1260 = vadd.f32 %v1252, 1.0
    %v1261 = vadd.f32 %v1253, 1.0
    %v1262 = vadd.f32 %v1254, 1.0
    %v1263 = vadd.f32 %v1255, 1.0
    %v1264 = vadd.f32 %v1256, 1.0
    %v1265 = vadd.f32 %v1257, 1.0
    %v1266 = vmul.f32 %v1258, 0.5
    %v1267 = vmul.f32 %v1259, 0.5
    %v1268 = vmul.f32 %v1260, 0.5
    %v1269 = vmul.f32 %v1261, 0.5
    %v1270 = vmul.f32 %v1262, 0.5
    %v1271 = vmul.f32 %v1263, 0.5
    %v1272 = vmul.f32 %v1264, 0.5
    %v1273 = vmul.f32 %v1265, 0.5
    %v1274 = vmul.f32 %v1266, 10.0
    %v1275 = vmul.f32 %v1267, 10.0
    %v1276 = vmul.f32 %v1268, 10.0
    %v1277 = vmul.f32 %v1269, 10.0
    %v1278 = vmul.f32 %v1270, 10.0
    %v1279 = vmul.f32 %v1271, 10.0
    %v1280 = vmul.f32 %v1272, 10.0
    %v1281 = vmul.f32 %v1273, 10.0
    %v1282 = vadd.f32 %v1274, 1.5
    %v1283 = vadd.f32 %v1275, 1.5
    %v1284 = vadd.f32 %v1276, 1.5
    %v1285 = vadd.f32 %v1277, 1.5
    %v1286 = vadd.f32 %v1278, 1.5
    %v1287 = vadd.f32 %v1279, 1.5
    %v1288 = vadd.f32 %v1280, 1.5
    %v1289 = vadd.f32 %v1281, 1.5
    %v1290 = vmul.f32 %v1282, %v1282
    %v1291 = vmul.f32 %v1283, %v1283
    %v1292 = vmul.f32 %v1284, %v1284
    %v1293 = vmul.f32 %v1285, %v1285
    %v1294 = vmul.f32 %v1286, %v1286
    %v1295 = vmul.f32 %v1287, %v1287
    %v1296 = vmul.f32 %v1288, %v1288
    %v1297 = vmul.f32 %v1289, %v1289
    %v1298 = vsub.f32 %v1290, 1.0
    %v1299 = vsub.f32 %v1291, 1.0
    %v1300 = vsub.f32 %v1292, 1.0
    %v1301 = vsub.f32 %v1293, 1.0
    %v1302 = vsub.f32 %v1294, 1.0
    %v1303 = vsub.f32 %v1295, 1.0
    %v1304 = vsub.f32 %v1296, 1.0
    %v1305 = vsub.f32 %v1297, 1.0
    %v1306 = vrsqrt.pop %v1298
    %v1307 = vmul.f32 %v1306, %v1298
    %v1308 = vmul.f32 %v1307, %v1306
    %v1309 = vmul.f32 0.5, %v1308
    %v1310 = vsub.f32 1.5, %v1309
    %v1311 = vmul.f32 %v1306, %v1310
    %v1312 = vmul.f32 %v1298, %v1311
    %vm1313 = vcmp.eq.f32.partialorder %v1298, inf
    %v1314 = vsel %vm1313, %v1298, %v1312
    %vm1315 = vcmp.eq.f32.partialorder %v1298, 0.0
    %v1316 = vand.u32 %v1298, 2147483648
    %v1317 = vsel %vm1315, %v1316, %v1314
    %v1318 = vrsqrt.pop %v1299
    %v1319 = vmul.f32 %v1318, %v1299
    %v1320 = vmul.f32 %v1319, %v1318
    %v1321 = vmul.f32 0.5, %v1320
    %v1322 = vsub.f32 1.5, %v1321
    %v1323 = vmul.f32 %v1318, %v1322
    %v1324 = vmul.f32 %v1299, %v1323
    %vm1325 = vcmp.eq.f32.partialorder %v1299, inf
    %v1326 = vsel %vm1325, %v1299, %v1324
    %vm1327 = vcmp.eq.f32.partialorder %v1299, 0.0
    %v1328 = vand.u32 %v1299, 2147483648
    %v1329 = vsel %vm1327, %v1328, %v1326
    %v1330 = vrsqrt.pop %v1300
    %v1331 = vmul.f32 %v1330, %v1300
    %v1332 = vmul.f32 %v1331, %v1330
    %v1333 = vmul.f32 0.5, %v1332
    %v1334 = vsub.f32 1.5, %v1333
    %v1335 = vmul.f32 %v1330, %v1334
    %v1336 = vmul.f32 %v1300, %v1335
    %vm1337 = vcmp.eq.f32.partialorder %v1300, inf
    %v1338 = vsel %vm1337, %v1300, %v1336
    %vm1339 = vcmp.eq.f32.partialorder %v1300, 0.0
    %v1340 = vand.u32 %v1300, 2147483648
    %v1341 = vsel %vm1339, %v1340, %v1338
    %v1342 = vrsqrt.pop %v1301
    %v1343 = vmul.f32 %v1342, %v1301
    %v1344 = vmul.f32 %v1343, %v1342
    %v1345 = vmul.f32 0.5, %v1344
    %v1346 = vsub.f32 1.5, %v1345
    %v1347 = vmul.f32 %v1342, %v1346
    %v1348 = vmul.f32 %v1301, %v1347
    %vm1349 = vcmp.eq.f32.partialorder %v1301, inf
    %v1350 = vsel %vm1349, %v1301, %v1348
    %vm1351 = vcmp.eq.f32.partialorder %v1301, 0.0
    %v1352 = vand.u32 %v1301, 2147483648
    %v1353 = vsel %vm1351, %v1352, %v1350
    %v1354 = vrsqrt.pop %v1302
    %v1355 = vmul.f32 %v1354, %v1302
    %v1356 = vmul.f32 %v1355, %v1354
    %v1357 = vmul.f32 0.5, %v1356
    %v1358 = vsub.f32 1.5, %v1357
    %v1359 = vmul.f32 %v1354, %v1358
    %v1360 = vmul.f32 %v1302, %v1359
    %vm1361 = vcmp.eq.f32.partialorder %v1302, inf
    %v1362 = vsel %vm1361, %v1302, %v1360
    %vm1363 = vcmp.eq.f32.partialorder %v1302, 0.0
    %v1364 = vand.u32 %v1302, 2147483648
    %v1365 = vsel %vm1363, %v1364, %v1362
    %v1366 = vrsqrt.pop %v1303
    %v1367 = vmul.f32 %v1366, %v1303
    %v1368 = vmul.f32 %v1367, %v1366
    %v1369 = vmul.f32 0.5, %v1368
    %v1370 = vsub.f32 1.5, %v1369
    %v1371 = vmul.f32 %v1366, %v1370
    %v1372 = vmul.f32 %v1303, %v1371
    %vm1373 = vcmp.eq.f32.partialorder %v1303, inf
    %v1374 = vsel %vm1373, %v1303, %v1372
    %vm1375 = vcmp.eq.f32.partialorder %v1303, 0.0
    %v1376 = vand.u32 %v1303, 2147483648
    %v1377 = vsel %vm1375, %v1376, %v1374
    %v1378 = vrsqrt.pop %v1304
    %v1379 = vmul.f32 %v1378, %v1304
    %v1380 = vmul.f32 %v1379, %v1378
    %v1381 = vmul.f32 0.5, %v1380
    %v1382 = vsub.f32 1.5, %v1381
    %v1383 = vmul.f32 %v1378, %v1382
    %v1384 = vmul.f32 %v1304, %v1383
    %vm1385 = vcmp.eq.f32.partialorder %v1304, inf
    %v1386 = vsel %vm1385, %v1304, %v1384
    %vm1387 = vcmp.eq.f32.partialorder %v1304, 0.0
    %v1388 = vand.u32 %v1304, 2147483648
    %v1389 = vsel %vm1387, %v1388, %v1386
    %v1390 = vrsqrt.pop %v1305
    %v1391 = vmul.f32 %v1390, %v1305
    %v1392 = vmul.f32 %v1391, %v1390
    %v1393 = vmul.f32 0.5, %v1392
    %v1394 = vsub.f32 1.5, %v1393
    %v1395 = vmul.f32 %v1390, %v1394
    %v1396 = vmul.f32 %v1305, %v1395
    %vm1397 = vcmp.eq.f32.partialorder %v1305, inf
    %v1398 = vsel %vm1397, %v1305, %v1396
    %vm1399 = vcmp.eq.f32.partialorder %v1305, 0.0
    %v1400 = vand.u32 %v1305, 2147483648
    %v1401 = vsel %vm1399, %v1400, %v1398
    %v1402 = vrsqrt.pop %v1234
    %v1403 = vmul.f32 %v1402, %v1234
    %v1404 = vmul.f32 %v1403, %v1402
    %v1405 = vmul.f32 0.5, %v1404
    %v1406 = vsub.f32 1.5, %v1405
    %v1407 = vmul.f32 %v1402, %v1406
    %vm1408 = vweird.f32 %v1234
    %vm1409 = vweird.f32 %v1402
    %vm1410 = vmor %vm1408, %vm1409
    %v1411 = vsel %vm1410, %v1402, %v1407
    %v1412 = vrsqrt.pop %v1235
    %v1413 = vmul.f32 %v1412, %v1235
    %v1414 = vmul.f32 %v1413, %v1412
    %v1415 = vmul.f32 0.5, %v1414
    %v1416 = vsub.f32 1.5, %v1415
    %v1417 = vmul.f32 %v1412, %v1416
    %vm1418 = vweird.f32 %v1235
    %vm1419 = vweird.f32 %v1412
    %vm1420 = vmor %vm1418, %vm1419
    %v1421 = vsel %vm1420, %v1412, %v1417
    %v1422 = vrsqrt.pop %v1236
    %v1423 = vmul.f32 %v1422, %v1236
    %v1424 = vmul.f32 %v1423, %v1422
    %v1425 = vmul.f32 0.5, %v1424
    %v1426 = vsub.f32 1.5, %v1425
    %v1427 = vmul.f32 %v1422, %v1426
    %vm1428 = vweird.f32 %v1236
    %vm1429 = vweird.f32 %v1422
    %vm1430 = vmor %vm1428, %vm1429
    %v1431 = vsel %vm1430, %v1422, %v1427
    %v1432 = vrsqrt.pop %v1237
    %v1433 = vmul.f32 %v1432, %v1237
    %v1434 = vmul.f32 %v1433, %v1432
    %v1435 = vmul.f32 0.5, %v1434
    %v1436 = vsub.f32 1.5, %v1435
    %v1437 = vmul.f32 %v1432, %v1436
    %vm1438 = vweird.f32 %v1237
    %vm1439 = vweird.f32 %v1432
    %vm1440 = vmor %vm1438, %vm1439
    %v1441 = vsel %vm1440, %v1432, %v1437
    %v1442 = vrsqrt.pop %v1238
    %v1443 = vmul.f32 %v1442, %v1238
    %v1444 = vmul.f32 %v1443, %v1442
    %v1445 = vmul.f32 0.5, %v1444
    %v1446 = vsub.f32 1.5, %v1445
    %v1447 = vmul.f32 %v1442, %v1446
    %vm1448 = vweird.f32 %v1238
    %vm1449 = vweird.f32 %v1442
    %vm1450 = vmor %vm1448, %vm1449
    %v1451 = vsel %vm1450, %v1442, %v1447
    %v1452 = vrsqrt.pop %v1239
    %v1453 = vmul.f32 %v1452, %v1239
    %v1454 = vmul.f32 %v1453, %v1452
    %v1455 = vmul.f32 0.5, %v1454
    %v1456 = vsub.f32 1.5, %v1455
    %v1457 = vmul.f32 %v1452, %v1456
    %vm1458 = vweird.f32 %v1239
    %vm1459 = vweird.f32 %v1452
    %vm1460 = vmor %vm1458, %vm1459
    %v1461 = vsel %vm1460, %v1452, %v1457
    %v1462 = vrsqrt.pop %v1240
    %v1463 = vmul.f32 %v1462, %v1240
    %v1464 = vmul.f32 %v1463, %v1462
    %v1465 = vmul.f32 0.5, %v1464
    %v1466 = vsub.f32 1.5, %v1465
    %v1467 = vmul.f32 %v1462, %v1466
    %vm1468 = vweird.f32 %v1240
    %vm1469 = vweird.f32 %v1462
    %vm1470 = vmor %vm1468, %vm1469
    %v1471 = vsel %vm1470, %v1462, %v1467
    %v1472 = vrsqrt.pop %v1241
    %v1473 = vmul.f32 %v1472, %v1241
    %v1474 = vmul.f32 %v1473, %v1472
    %v1475 = vmul.f32 0.5, %v1474
    %v1476 = vsub.f32 1.5, %v1475
    %v1477 = vmul.f32 %v1472, %v1476
    %vm1478 = vweird.f32 %v1241
    %vm1479 = vweird.f32 %v1472
    %vm1480 = vmor %vm1478, %vm1479
    %v1481 = vsel %vm1480, %v1472, %v1477
    %v1482 = vmul.f32 %v1317, %v1411
    %v1483 = vmul.f32 %v1329, %v1421
    %v1484 = vmul.f32 %v1341, %v1431
    %v1485 = vmul.f32 %v1353, %v1441
    %v1486 = vmul.f32 %v1365, %v1451
    %v1487 = vmul.f32 %v1377, %v1461
    %v1488 = vmul.f32 %v1389, %v1471
    %v1489 = vmul.f32 %v1401, %v1481
    %v1490 = vmax.f32 %v1482, 0.0001
    %v1491 = vmax.f32 %v1483, 0.0001
    %v1492 = vmax.f32 %v1484, 0.0001
    %v1493 = vmax.f32 %v1485, 0.0001
    %v1494 = vmax.f32 %v1486, 0.0001
    %v1495 = vmax.f32 %v1487, 0.0001
    %v1496 = vmax.f32 %v1488, 0.0001
    %v1497 = vmax.f32 %v1489, 0.0001
    %1499 = vset.pattern.permute.xlu0 0
    %1500 = vperm.xlu0 %1499, %v1490
    %v1501 = vpop.permute.xlu0 %1500
    %1504 = vset.pattern.permute.xlu0 0
    %1505 = vperm.xlu0 %1504, %v1491
    %v1506 = vpop.permute.xlu0 %1505
    %1509 = vset.pattern.permute.xlu0 0
    %1510 = vperm.xlu0 %1509, %v1492
    %v1511 = vpop.permute.xlu0 %1510
    %1514 = vset.pattern.permute.xlu0 0
    %1515 = vperm.xlu0 %1514, %v1493
    %v1516 = vpop.permute.xlu0 %1515
    %1519 = vset.pattern.permute.xlu0 0
    %1520 = vperm.xlu0 %1519, %v1494
    %v1521 = vpop.permute.xlu0 %1520
    %1524 = vset.pattern.permute.xlu0 0
    %1525 = vperm.xlu0 %1524, %v1495
    %v1526 = vpop.permute.xlu0 %1525
    %1529 = vset.pattern.permute.xlu0 0
    %1530 = vperm.xlu0 %1529, %v1496
    %v1531 = vpop.permute.xlu0 %1530
    %1534 = vset.pattern.permute.xlu0 0
    %1535 = vperm.xlu0 %1534, %v1497
    %v1536 = vpop.permute.xlu0 %1535
    %v1538 = vmul.f32 %v1175, %v1501
    %v1539 = vmul.f32 %v1177, %v1506
    %v1540 = vmul.f32 %v1180, %v1511
    %v1541 = vmul.f32 %v1182, %v1516
    %v1542 = vmul.f32 %v1185, %v1521
    %v1543 = vmul.f32 %v1187, %v1526
    %v1544 = vmul.f32 %v1190, %v1531
    %v1545 = vmul.f32 %v1192, %v1536
    %1547 = vset.pattern.permute.xlu0 0
    %1548 = vperm.xlu0 %1547, %v1282
    %v1549 = vpop.permute.xlu0 %1548
    %1552 = vset.pattern.permute.xlu0 0
    %1553 = vperm.xlu0 %1552, %v1283
    %v1554 = vpop.permute.xlu0 %1553
    %1557 = vset.pattern.permute.xlu0 0
    %1558 = vperm.xlu0 %1557, %v1284
    %v1559 = vpop.permute.xlu0 %1558
    %1562 = vset.pattern.permute.xlu0 0
    %1563 = vperm.xlu0 %1562, %v1285
    %v1564 = vpop.permute.xlu0 %1563
    %1567 = vset.pattern.permute.xlu0 0
    %1568 = vperm.xlu0 %1567, %v1286
    %v1569 = vpop.permute.xlu0 %1568
    %1572 = vset.pattern.permute.xlu0 0
    %1573 = vperm.xlu0 %1572, %v1287
    %v1574 = vpop.permute.xlu0 %1573
    %1577 = vset.pattern.permute.xlu0 0
    %1578 = vperm.xlu0 %1577, %v1288
    %v1579 = vpop.permute.xlu0 %1578
    %1582 = vset.pattern.permute.xlu0 0
    %1583 = vperm.xlu0 %1582, %v1289
    %v1584 = vpop.permute.xlu0 %1583
    %v1586 = vsel %vm463, %v1549, %v1538
    %v1587 = vsel %vm463, %v1554, %v1539
    %v1588 = vsel %vm463, %v1559, %v1540
    %v1589 = vsel %vm463, %v1564, %v1541
    %v1590 = vsel %vm463, %v1569, %v1542
    %v1591 = vsel %vm463, %v1574, %v1543
    %v1592 = vsel %vm463, %v1579, %v1544
    %v1593 = vsel %vm463, %v1584, %v1545
    %v1594 = vpack.c.bf16 %v1587, %v1586
    %v1595 = vpack.c.bf16 %v1589, %v1588
    %v1596 = vpack.c.bf16 %v1591, %v1590
    %v1597 = vpack.c.bf16 %v1593, %v1592
    %1598 = vmatpush.bf16.msra.mxu0 0
    %1599 = vmatpush.bf16.msra.mxu0 0
    %1600 = vmatpush.bf16.msra.mxu0 0
    %1601 = vmatpush.bf16.msra.mxu0 0
    %1602 = vmatpush.bf16.msra.mxu0 %v1597
    %1603 = vmatpush.bf16.msra.mxu0 %v1596
    %1604 = vmatpush.bf16.msra.mxu0 %v1595
    %1605 = vmatpush.bf16.msra.mxu0 %v1594
    %1606 = vmatmul.bf16.gmra.mxu0 %v891
    %v1607 = vpop.f32.mrf.mxu0
    %v1608 = vadd.f32 0.0, %v1607
    %v1609 = vpop.f32.mrf.mxu0
    %v1610 = vadd.f32 0.0, %v1609
    %1611 = vmatmul.bf16.gmra.mxu0 %v894
    %v1612 = vpop.f32.mrf.mxu0
    %v1613 = vadd.f32 0.0, %v1612
    %v1614 = vpop.f32.mrf.mxu0
    %v1615 = vadd.f32 0.0, %v1614
    %1616 = vmatmul.bf16.gmra.mxu0 %v897
    %v1617 = vpop.f32.mrf.mxu0
    %v1618 = vadd.f32 0.0, %v1617
    %v1619 = vpop.f32.mrf.mxu0
    %v1620 = vadd.f32 0.0, %v1619
    %1621 = vmatmul.bf16.gmra.mxu0 %v900
    %v1622 = vpop.f32.mrf.mxu0
    %v1623 = vadd.f32 0.0, %v1622
    %v1624 = vpop.f32.mrf.mxu0
    %v1625 = vadd.f32 0.0, %v1624
    %1626 = vdwg.mxu0
    %v1627 = vmul.f32 %v1608, %v1608
    %v1628 = vmul.f32 %v1610, %v1610
    %v1629 = vmul.f32 %v1613, %v1613
    %v1630 = vmul.f32 %v1615, %v1615
    %v1631 = vmul.f32 %v1618, %v1618
    %v1632 = vmul.f32 %v1620, %v1620
    %v1633 = vmul.f32 %v1623, %v1623
    %v1634 = vmul.f32 %v1625, %v1625
    %v1635 = vsel %vm472, %v1627, 0.0
    %1636 = vadd.xlane.f32.xlu0 %v1635
    %v1637 = vpop.xlane.xlu0 %1636
    %v1638 = vsel %vm472, %v1628, 0.0
    %1639 = vadd.xlane.f32.xlu0 %v1638
    %v1640 = vpop.xlane.xlu0 %1639
    %v1641 = vsel %vm472, %v1629, 0.0
    %1642 = vadd.xlane.f32.xlu0 %v1641
    %v1643 = vpop.xlane.xlu0 %1642
    %v1644 = vsel %vm472, %v1630, 0.0
    %1645 = vadd.xlane.f32.xlu0 %v1644
    %v1646 = vpop.xlane.xlu0 %1645
    %v1647 = vsel %vm472, %v1631, 0.0
    %1648 = vadd.xlane.f32.xlu0 %v1647
    %v1649 = vpop.xlane.xlu0 %1648
    %v1650 = vsel %vm472, %v1632, 0.0
    %1651 = vadd.xlane.f32.xlu0 %v1650
    %v1652 = vpop.xlane.xlu0 %1651
    %v1653 = vsel %vm472, %v1633, 0.0
    %1654 = vadd.xlane.f32.xlu0 %v1653
    %v1655 = vpop.xlane.xlu0 %1654
    %v1656 = vsel %vm472, %v1634, 0.0
    %1657 = vadd.xlane.f32.xlu0 %v1656
    %v1658 = vpop.xlane.xlu0 %1657
    %v1659 = vmul.f32 %v1608, 2.0
    %v1660 = vmul.f32 %v1610, 2.0
    %v1661 = vmul.f32 %v1613, 2.0
    %v1662 = vmul.f32 %v1615, 2.0
    %v1663 = vmul.f32 %v1618, 2.0
    %v1664 = vmul.f32 %v1620, 2.0
    %v1665 = vmul.f32 %v1623, 2.0
    %v1666 = vmul.f32 %v1625, 2.0
    %v1667 = vmul.f32 %v1659, %v1608
    %v1668 = vmul.f32 %v1660, %v1610
    %v1669 = vmul.f32 %v1661, %v1613
    %v1670 = vmul.f32 %v1662, %v1615
    %v1671 = vmul.f32 %v1663, %v1618
    %v1672 = vmul.f32 %v1664, %v1620
    %v1673 = vmul.f32 %v1665, %v1623
    %v1674 = vmul.f32 %v1666, %v1625
    %v1675 = vsub.f32 %v1667, %v1637
    %v1676 = vsub.f32 %v1668, %v1640
    %v1677 = vsub.f32 %v1669, %v1643
    %v1678 = vsub.f32 %v1670, %v1646
    %v1679 = vsub.f32 %v1671, %v1649
    %v1680 = vsub.f32 %v1672, %v1652
    %v1681 = vsub.f32 %v1673, %v1655
    %v1682 = vsub.f32 %v1674, %v1658
    %v1683 = vand.u32 2147483647, %v1675
    %v1684 = vand.u32 2147483647, %v1676
    %v1685 = vand.u32 2147483647, %v1677
    %v1686 = vand.u32 2147483647, %v1678
    %v1687 = vand.u32 2147483647, %v1679
    %v1688 = vand.u32 2147483647, %v1680
    %v1689 = vand.u32 2147483647, %v1681
    %v1690 = vand.u32 2147483647, %v1682
    %v1691 = vmax.f32 %v1683, 1e-08
    %v1692 = vmax.f32 %v1684, 1e-08
    %v1693 = vmax.f32 %v1685, 1e-08
    %v1694 = vmax.f32 %v1686, 1e-08
    %v1695 = vmax.f32 %v1687, 1e-08
    %v1696 = vmax.f32 %v1688, 1e-08
    %v1697 = vmax.f32 %v1689, 1e-08
    %v1698 = vmax.f32 %v1690, 1e-08
    %v1699 = vrsqrt.pop %v1691
    %v1700 = vmul.f32 %v1699, %v1691
    %v1701 = vmul.f32 %v1700, %v1699
    %v1702 = vmul.f32 0.5, %v1701
    %v1703 = vsub.f32 1.5, %v1702
    %v1704 = vmul.f32 %v1699, %v1703
    %vm1705 = vweird.f32 %v1691
    %vm1706 = vweird.f32 %v1699
    %vm1707 = vmor %vm1705, %vm1706
    %v1708 = vsel %vm1707, %v1699, %v1704
    %v1709 = vrsqrt.pop %v1692
    %v1710 = vmul.f32 %v1709, %v1692
    %v1711 = vmul.f32 %v1710, %v1709
    %v1712 = vmul.f32 0.5, %v1711
    %v1713 = vsub.f32 1.5, %v1712
    %v1714 = vmul.f32 %v1709, %v1713
    %vm1715 = vweird.f32 %v1692
    %vm1716 = vweird.f32 %v1709
    %vm1717 = vmor %vm1715, %vm1716
    %v1718 = vsel %vm1717, %v1709, %v1714
    %v1719 = vrsqrt.pop %v1693
    %v1720 = vmul.f32 %v1719, %v1693
    %v1721 = vmul.f32 %v1720, %v1719
    %v1722 = vmul.f32 0.5, %v1721
    %v1723 = vsub.f32 1.5, %v1722
    %v1724 = vmul.f32 %v1719, %v1723
    %vm1725 = vweird.f32 %v1693
    %vm1726 = vweird.f32 %v1719
    %vm1727 = vmor %vm1725, %vm1726
    %v1728 = vsel %vm1727, %v1719, %v1724
    %v1729 = vrsqrt.pop %v1694
    %v1730 = vmul.f32 %v1729, %v1694
    %v1731 = vmul.f32 %v1730, %v1729
    %v1732 = vmul.f32 0.5, %v1731
    %v1733 = vsub.f32 1.5, %v1732
    %v1734 = vmul.f32 %v1729, %v1733
    %vm1735 = vweird.f32 %v1694
    %vm1736 = vweird.f32 %v1729
    %vm1737 = vmor %vm1735, %vm1736
    %v1738 = vsel %vm1737, %v1729, %v1734
    %v1739 = vrsqrt.pop %v1695
    %v1740 = vmul.f32 %v1739, %v1695
    %v1741 = vmul.f32 %v1740, %v1739
    %v1742 = vmul.f32 0.5, %v1741
    %v1743 = vsub.f32 1.5, %v1742
    %v1744 = vmul.f32 %v1739, %v1743
    %vm1745 = vweird.f32 %v1695
    %vm1746 = vweird.f32 %v1739
    %vm1747 = vmor %vm1745, %vm1746
    %v1748 = vsel %vm1747, %v1739, %v1744
    %v1749 = vrsqrt.pop %v1696
    %v1750 = vmul.f32 %v1749, %v1696
    %v1751 = vmul.f32 %v1750, %v1749
    %v1752 = vmul.f32 0.5, %v1751
    %v1753 = vsub.f32 1.5, %v1752
    %v1754 = vmul.f32 %v1749, %v1753
    %vm1755 = vweird.f32 %v1696
    %vm1756 = vweird.f32 %v1749
    %vm1757 = vmor %vm1755, %vm1756
    %v1758 = vsel %vm1757, %v1749, %v1754
    %v1759 = vrsqrt.pop %v1697
    %v1760 = vmul.f32 %v1759, %v1697
    %v1761 = vmul.f32 %v1760, %v1759
    %v1762 = vmul.f32 0.5, %v1761
    %v1763 = vsub.f32 1.5, %v1762
    %v1764 = vmul.f32 %v1759, %v1763
    %vm1765 = vweird.f32 %v1697
    %vm1766 = vweird.f32 %v1759
    %vm1767 = vmor %vm1765, %vm1766
    %v1768 = vsel %vm1767, %v1759, %v1764
    %v1769 = vrsqrt.pop %v1698
    %v1770 = vmul.f32 %v1769, %v1698
    %v1771 = vmul.f32 %v1770, %v1769
    %v1772 = vmul.f32 0.5, %v1771
    %v1773 = vsub.f32 1.5, %v1772
    %v1774 = vmul.f32 %v1769, %v1773
    %vm1775 = vweird.f32 %v1698
    %vm1776 = vweird.f32 %v1769
    %vm1777 = vmor %vm1775, %vm1776
    %v1778 = vsel %vm1777, %v1769, %v1774
    %1780 = vset.pattern.permute.xlu0 0
    %1781 = vperm.xlu0 %1780, %v1708
    %v1782 = vpop.permute.xlu0 %1781
    %1785 = vset.pattern.permute.xlu0 0
    %1786 = vperm.xlu0 %1785, %v1718
    %v1787 = vpop.permute.xlu0 %1786
    %1790 = vset.pattern.permute.xlu0 0
    %1791 = vperm.xlu0 %1790, %v1728
    %v1792 = vpop.permute.xlu0 %1791
    %1795 = vset.pattern.permute.xlu0 0
    %1796 = vperm.xlu0 %1795, %v1738
    %v1797 = vpop.permute.xlu0 %1796
    %1800 = vset.pattern.permute.xlu0 0
    %1801 = vperm.xlu0 %1800, %v1748
    %v1802 = vpop.permute.xlu0 %1801
    %1805 = vset.pattern.permute.xlu0 0
    %1806 = vperm.xlu0 %1805, %v1758
    %v1807 = vpop.permute.xlu0 %1806
    %1810 = vset.pattern.permute.xlu0 0
    %1811 = vperm.xlu0 %1810, %v1768
    %v1812 = vpop.permute.xlu0 %1811
    %1815 = vset.pattern.permute.xlu0 0
    %1816 = vperm.xlu0 %1815, %v1778
    %v1817 = vpop.permute.xlu0 %1816
    %v1819 = vmul.f32 %v1608, %v1782
    %v1820 = vmul.f32 %v1610, %v1787
    %v1821 = vmul.f32 %v1613, %v1792
    %v1822 = vmul.f32 %v1615, %v1797
    %v1823 = vmul.f32 %v1618, %v1802
    %v1824 = vmul.f32 %v1620, %v1807
    %v1825 = vmul.f32 %v1623, %v1812
    %v1826 = vmul.f32 %v1625, %v1817
    %v1827 = vpack.c.bf16 %v1820, %v1819
    %v1828 = vpack.c.bf16 %v1822, %v1821
    %v1829 = vpack.c.bf16 %v1824, %v1823
    %v1830 = vpack.c.bf16 %v1826, %v1825
    %v1831 = vld [vmem:[#allocation2] sm:$0xff]
    %v1832 = vld [vmem:[#allocation2 + $0x8] sm:$0xff]
    %v1833 = vld [vmem:[#allocation2 + $0x10] sm:$0xff]
    %v1834 = vld [vmem:[#allocation2 + $0x18] sm:$0xff]
    %v1835 = vpack.c.bf16 %v1832, %v1831
    %v1836 = vpack.c.bf16 %v1834, %v1833
    %v1837 = vld [vmem:[%s8] sm:$0x1]
    %v1839 = vperm.slane %v1837, 0
    %v1842 = vsel %vm472, %v1827, 0
    %v1845 = vsel %vm472, %v1828, 0
    %v1848 = vsel %vm472, %v1829, 0
    %v1851 = vsel %vm472, %v1830, 0
    %1853 = vmatpush.bf16.msra.mxu0 0
    %1854 = vmatpush.bf16.msra.mxu0 0
    %1855 = vmatpush.bf16.msra.mxu0 0
    %1856 = vmatpush.bf16.msra.mxu0 0
    %1857 = vmatpush.bf16.msra.mxu0 0
    %1858 = vmatpush.bf16.msra.mxu0 0
    %1859 = vmatpush.bf16.msra.mxu0 %v1836
    %1860 = vmatpush.bf16.msra.mxu0 %v1835
    %1861 = vmatmul.bf16.gmra.mxu0 %v1842
    %v1862 = vpop.f32.mrf.mxu0
    %v1863 = vadd.f32 %v1839, %v1862
    %v1864 = vpop.f32.mrf.mxu0
    %v1865 = vadd.f32 %v1839, %v1864
    %1866 = vmatmul.bf16.gmra.mxu0 %v1845
    %v1867 = vpop.f32.mrf.mxu0
    %v1868 = vadd.f32 %v1839, %v1867
    %v1869 = vpop.f32.mrf.mxu0
    %v1870 = vadd.f32 %v1839, %v1869
    %1871 = vmatmul.bf16.gmra.mxu0 %v1848
    %v1872 = vpop.f32.mrf.mxu0
    %v1873 = vadd.f32 %v1839, %v1872
    %v1874 = vpop.f32.mrf.mxu0
    %v1875 = vadd.f32 %v1839, %v1874
    %1876 = vmatmul.bf16.gmra.mxu0 %v1851
    %v1877 = vpop.f32.mrf.mxu0
    %v1878 = vadd.f32 %v1839, %v1877
    %v1879 = vpop.f32.mrf.mxu0
    %v1880 = vadd.f32 %v1839, %v1879
    %1881 = vdwg.mxu0
    %1882 = vst [vmem:[#allocation5] sm:$0xff] %v1863
    %1883 = vst [vmem:[#allocation5 + $0x8] sm:$0xff] %v1865
    %1884 = vst [vmem:[#allocation5 + $0x10] sm:$0xff] %v1868
    %1885 = vst [vmem:[#allocation5 + $0x18] sm:$0xff] %v1870
    %1886 = vst [vmem:[#allocation5 + $0x20] sm:$0xff] %v1873
    %1887 = vst [vmem:[#allocation5 + $0x28] sm:$0xff] %v1875
    %1888 = vst [vmem:[#allocation5 + $0x30] sm:$0xff] %v1878
    %1889 = vst [vmem:[#allocation5 + $0x38] sm:$0xff] %v1880
    // Predicated region
    $region42: #{tpu_custom_call.1} parent=1 // pred_check
      _
    $region43: #{tpu_custom_call.1} parent=1 // pred_check_branch
      %1891 = sbr.rel (0) target = $region45
    $region44: #{tpu_custom_call.1} parent=1 // pred_region
      %1893 = vsyncadd [#allocation4], 0
      %s1894 = sshll.u32 [#allocation5], 4
      %s1895 = int_to_ptr.vmem [resolvable:$true] %s1894
      %s1896 = sshll.u32 %s9, 4
      %s1897 = int_to_ptr.hbm [resolvable:$true] %s1896
      %1902 = dma.vmem_to_hbm [thread:$0]  %s1895, 1024, %s1897, [#allocation4], 128, 128, 8
    $region45: #{tpu_custom_call.1} parent=1 // pred_fallthru
      _
    // Predicated region
    $region46: #{tpu_custom_call.1} parent=1 // pred_check
      _
    $region47: #{tpu_custom_call.1} parent=1 // pred_check_branch
      %1904 = sbr.rel (0) target = $region49
    $region48: #{tpu_custom_call.1} parent=1 // pred_region
      %1906 = dma.done [#allocation4], 1024
    $region49: #{tpu_custom_call.1} parent=1 // pred_fallthru
      _
    %1907 = vsyncpa [#allocation3], 1
    %1908 = vsyncpa [#allocation4], 1

</llo_original>
